<compile_context>
chip_gen: v6e
topology: v6e:2x2x1
jax: 0.10.0
libtpu: 0.0.40
codegen_flags: <defaults>
</compile_context>

<pallas_src>
import functools

import jax
import jax.numpy as jnp
from jax.experimental import pallas as pl
from jax.experimental.pallas import tpu as pltpu


# ----------------------------- Pallas kernel --------------------------------

def _bigru_classify_kernel(
    x_ref,      # (S*B, E)   time-major embedded code (time major, batch minor)
    wih_ref,    # (E, 6H)    [W_ih_fwd | W_ih_bwd], gate cols [r, z, n] per direction
    bih_ref,    # (1, 6H)    b_ih (+ b_hh folded in for the r/z gates)
    whhf_ref,   # (H, 3H)    forward recurrent weight
    whhb_ref,   # (H, 3H)    backward recurrent weight
    bhnf_ref,   # (1, H)     forward b_hn (stays inside r * (...))
    bhnb_ref,   # (1, H)     backward b_hn
    wcls_ref,   # (2H, Cp)   classifier weight, lane-padded to 128
    bcls_ref,   # (1, Cp)    classifier bias (padded cols = -1e30)
    tgt_ref,    # (B, 1)     int32 target ids
    p_ref,      # out: (B, Cp) logits (lane-dense slab; wrapper slices [:C])
    loss_ref,   # out SMEM: (1, 1) mean CE loss
    *, seq_len, batch, hidden,
):
    S, B, H = seq_len, batch, hidden

    # ---- hoisted input projection: one dense MXU matmul, no structural zeros ----
    gx = jnp.dot(x_ref[...], wih_ref[...],
                 preferred_element_type=jnp.float32) + bih_ref[...]      # (S*B, 6H)
    # Time-major: rows [i*B:(i+1)*B] hold time step i for the whole batch.

    whh_f = whhf_ref[...]                                                # (H, 3H)
    whh_b = whhb_ref[...]
    bhn_f = jnp.broadcast_to(bhnf_ref[...], (B, H))                      # hoisted
    bhn_b = jnp.broadcast_to(bhnb_ref[...], (B, H))

    # ---- fully-unrolled bidirectional recurrence (two independent chains) -------
    # TODO(synk): for production S, chunk the hoisted projection over S into a
    # double-buffered VMEM scratch (pltpu.emit_pipeline) and run
    # lax.fori_loop(..., unroll=4..8) per chunk instead of a full unroll.
    h_f = jnp.zeros((B, H), jnp.float32)
    h_b = jnp.zeros((B, H), jnp.float32)
    for i in range(S):                           # static trip count -> static slices
        af = gx[i * B:(i + 1) * B, :3 * H]            # fwd gates at time i
        ab = gx[(S - 1 - i) * B:(S - i) * B, 3 * H:]  # bwd gates at time S-1-i

        ghf = jnp.dot(h_f, whh_f, preferred_element_type=jnp.float32)    # (B, 3H)
        ghb = jnp.dot(h_b, whh_b, preferred_element_type=jnp.float32)

        rz_f = jax.nn.sigmoid(af[:, :2 * H] + ghf[:, :2 * H])
        rz_b = jax.nn.sigmoid(ab[:, :2 * H] + ghb[:, :2 * H])
        r_f, z_f = rz_f[:, :H], rz_f[:, H:]
        r_b, z_b = rz_b[:, :H], rz_b[:, H:]

        n_f = jnp.tanh(af[:, 2 * H:] + r_f * (ghf[:, 2 * H:] + bhn_f))
        n_b = jnp.tanh(ab[:, 2 * H:] + r_b * (ghb[:, 2 * H:] + bhn_b))

        h_f = (1.0 - z_f) * n_f + z_f * h_f
        h_b = (1.0 - z_b) * n_b + z_b * h_b

    # h_f processed t = 0..S-1, h_b processed t = S-1..0 -> final states equal
    # torch.cat((b[0], b[1]), dim=1).
    h = jnp.concatenate([h_f, h_b], axis=1)                              # (B, 2H)

    # ---- classifier + cross-entropy epilogue (lane-dense 128-wide output) -------
    logits = jnp.dot(h, wcls_ref[...],
                     preferred_element_type=jnp.float32) + bcls_ref[...]  # (B, Cp)
    p_ref[...] = logits

    m = jnp.max(logits, axis=1, keepdims=True)
    lse = m + jnp.log(jnp.sum(jnp.exp(logits - m), axis=1, keepdims=True))  # (B, 1)
    col = jax.lax.broadcasted_iota(jnp.int32, logits.shape, 1)
    picked = jnp.sum(jnp.where(col == tgt_ref[...], logits, 0.0),
                     axis=1, keepdims=True)                               # (B, 1)
    loss_ref[0, 0] = jnp.sum(lse - picked) / B


# ------------------------------ JAX wrapper ----------------------------------

def _embed_max_norm(emb_table, ids):
    """nn.Embedding(..., max_norm=True) lookup: rows renormalized to L2 norm <= 1."""
    # TODO(synk): PyTorch's max_norm mutates the embedding weight in place; here the
    # renorm is forward-only (identical forward output).
    emb = emb_table[ids]                                                  # (B, S, E)
    norms = jnp.sqrt(jnp.sum(emb * emb, axis=-1, keepdims=True))
    scale = jnp.minimum(1.0, 1.0 / jnp.maximum(norms, 1e-7))
    return emb * scale


def _build_fused_params(params):
    """Re-lay per-direction GRU weights into the fused kernel layout.

    Input-projection weight is the dense concat [W_ih_fwd | W_ih_bwd] (E, 6H);
    b_ih + b_hh are folded for r/z gates (the n-gate b_hh stays inside the r gate).
    Pure layout plumbing done once per parameter set.
    """
    H = params["whh_f"].shape[0]
    wih = jnp.concatenate([params["wih_f"], params["wih_b"]], axis=1)     # (E, 6H)

    def fold(bih, bhh):
        return jnp.concatenate([bih[:, :2 * H] + bhh[:, :2 * H],
                                bih[:, 2 * H:]], axis=1)                  # (1, 3H)

    bih = jnp.concatenate([fold(params["bih_f"], params["bhh_f"]),
                           fold(params["bih_b"], params["bhh_b"])], axis=1)  # (1, 6H)
    bhn_f = params["bhh_f"][:, 2 * H:]                                    # (1, H)
    bhn_b = params["bhh_b"][:, 2 * H:]                                    # (1, H)
    return wih, bih, bhn_f, bhn_b, H


def action_word_generate_forward(code_word_rep, code_len, tgt_action_word, params):
    # TODO(synk): code_len is loaded but never consumed by `self.rnn(code_rep)` in the
    # reference forward, so padded positions are processed like real tokens.
    del code_len
    B, S = code_word_rep.shape
    C = params["wcls"].shape[1]

    wih, bih, bhn_f, bhn_b, H = _build_fused_params(params)

    # Lane-pad the classifier to a dense 128-lane output slab; padded bias columns
    # get -1e30 so they contribute nothing to max / logsumexp.
    Cp = pl.cdiv(C, 128) * 128
    wcls_p = jnp.zeros((2 * H, Cp), jnp.float32).at[:, :C].set(params["wcls"])
    bcls_p = jnp.full((1, Cp), -1e30, jnp.float32).at[:, :C].set(params["bcls"])

    # Embedding lookup (+ max_norm renorm) stays in plain JAX (data-dependent gather).
    emb = _embed_max_norm(params["emb"], code_word_rep).astype(jnp.float32)   # (B,S,E)
    # Time-major layout so per-step kernel slices are leading-axis (sublane) slabs.
    x_tm = jnp.transpose(emb, (1, 0, 2)).reshape(S * B, emb.shape[-1])        # (S*B,E)

    tgt = tgt_action_word.astype(jnp.int32).reshape(B, 1)

    kernel = functools.partial(_bigru_classify_kernel,
                               seq_len=S, batch=B, hidden=H)
    vmem = pl.BlockSpec(memory_space=pltpu.MemorySpace.VMEM)
    smem = pl.BlockSpec(memory_space=pltpu.MemorySpace.SMEM)
    # TODO(synk): at production shapes, cast MXU dot operands to bf16 (keep h state,
    # gate math and the CE epilogue in f32), tile over B with a ("parallel",) grid
    # axis for v7x's 2 TensorCores, and set
    # pltpu.CompilerParams(vmem_limit_bytes=...) with ~half the v6e tile size for
    # v7x's 64 MiB VMEM; at these toy sizes (<100 KB) a gridless whole-resident f32
    # call is optimal.
    p_pad, loss = pl.pallas_call(
        kernel,
        out_shape=(jax.ShapeDtypeStruct((B, Cp), jnp.float32),
                   jax.ShapeDtypeStruct((1, 1), jnp.float32)),
        in_specs=[vmem] * 10,
        out_specs=(vmem, smem),
    )(x_tm, wih, bih, params["whh_f"], params["whh_b"], bhn_f, bhn_b,
      wcls_p, bcls_p, tgt)
    return p_pad[:, :C], loss[0, 0]


# ---------------------------- pure-JAX reference ------------------------------

def reference_forward(code_word_rep, tgt_action_word, params):
    B, S = code_word_rep.shape
    H = params["whh_f"].shape[0]

    emb = _embed_max_norm(params["emb"], code_word_rep)
    x = jnp.transpose(emb, (1, 0, 2)).astype(jnp.float32)

    def run_dir(wih, whh, bih, bhh, reverse):
        h = jnp.zeros((B, H), jnp.float32)
        ts = range(S - 1, -1, -1) if reverse else range(S)
        for t in ts:
            gx = x[t] @ wih + bih
            gh = h @ whh + bhh
            r = jax.nn.sigmoid(gx[:, :H] + gh[:, :H])
            z = jax.nn.sigmoid(gx[:, H:2 * H] + gh[:, H:2 * H])
            n = jnp.tanh(gx[:, 2 * H:] + r * gh[:, 2 * H:])
            h = (1.0 - z) * n + z * h
        return h

    h_f = run_dir(params["wih_f"], params["whh_f"], params["bih_f"], params["bhh_f"], False)
    h_b = run_dir(params["wih_b"], params["whh_b"], params["bih_b"], params["bhh_b"], True)
    logits = jnp.concatenate([h_f, h_b], axis=1) @ params["wcls"] + params["bcls"]
    lse = jax.scipy.special.logsumexp(logits, axis=1)
    picked = jnp.take_along_axis(logits, tgt_action_word[:, None], axis=1)[:, 0]
    return logits, jnp.mean(lse - picked)


# ------------------------------ param init ------------------------------------

def init_params(key, vocab, emsize, nhid, n_classes):
    H = nhid // 2
    keys = jax.random.split(key, 11)

    def u(k, shape, scale=0.1):
        return jax.random.uniform(k, shape, jnp.float32, -scale, scale)

    return dict(
        emb=u(keys[0], (vocab, emsize), 1.0),
        wih_f=u(keys[1], (emsize, 3 * H)),
        whh_f=u(keys[2], (H, 3 * H)),
        bih_f=u(keys[3], (1, 3 * H)),
        bhh_f=u(keys[4], (1, 3 * H)),
        wih_b=u(keys[5], (emsize, 3 * H)),
        whh_b=u(keys[6], (H, 3 * H)),
        bih_b=u(keys[7], (1, 3 * H)),
        bhh_b=u(keys[8], (1, 3 * H)),
        wcls=u(keys[9], (nhid, n_classes)),
        bcls=u(keys[10], (1, n_classes)),
    )


# --------------------------------- main ---------------------------------------

if __name__ == "__main__":
    B, S = 2, 8                 # batch, sequence length
    VOCAB, EMSIZE, NHID = 50, 32, 32
    ACTION_WORD_MAP_LEN = 20    # len(action_word_map)
    C = ACTION_WORD_MAP_LEN // 2

    key = jax.random.PRNGKey(0)
    k_ids, k_tgt, k_params = jax.random.split(key, 3)

    code_word_rep = jax.random.randint(k_ids, (B, S), 0, VOCAB, dtype=jnp.int32)
    code_len = jnp.full((B,), S, dtype=jnp.int32)
    tgt_action_word = jax.random.randint(k_tgt, (B,), 0, C, dtype=jnp.int32)

    params = init_params(k_params, VOCAB, EMSIZE, NHID, C)

    p, loss = action_word_generate_forward(code_word_rep, code_len, tgt_action_word, params)
    jax.block_until_ready((p, loss))

    p_ref, loss_ref = reference_forward(code_word_rep, tgt_action_word, params)
    assert p.shape == (B, C) and loss.shape == ()
    assert jnp.allclose(p, p_ref, atol=1e-3, rtol=1e-3), "logits mismatch vs JAX reference"
    assert jnp.allclose(loss, loss_ref, atol=1e-3, rtol=1e-3), "loss mismatch vs JAX reference"

    print("KERNEL_OK")
</pallas_src>

<mosaic_0001>
module attributes {stable_mosaic.version = 11 : i64} {
  func.func @_bigru_classify_kernel(%arg0: memref<16x32xf32, #tpu.memory_space<vmem>>, %arg1: memref<32x96xf32, #tpu.memory_space<vmem>>, %arg2: memref<1x96xf32, #tpu.memory_space<vmem>>, %arg3: memref<16x48xf32, #tpu.memory_space<vmem>>, %arg4: memref<16x48xf32, #tpu.memory_space<vmem>>, %arg5: memref<1x16xf32, #tpu.memory_space<vmem>>, %arg6: memref<1x16xf32, #tpu.memory_space<vmem>>, %arg7: memref<32x128xf32, #tpu.memory_space<vmem>>, %arg8: memref<1x128xf32, #tpu.memory_space<vmem>>, %arg9: memref<2x1xi32, #tpu.memory_space<vmem>>, %arg10: memref<2x128xf32, #tpu.memory_space<vmem>>, %arg11: memref<1x1xf32, #tpu.memory_space<smem>>) attributes {dimension_semantics = [], scalar_prefetch = 0 : i64, scratch_operands = 0 : i64, tpu.core_type = #tpu.core_type<tc>} {
    %c0 = arith.constant 0 : index
    %c0_0 = arith.constant 0 : index
    %0 = vector.load %arg0[%c0, %c0_0] : memref<16x32xf32, #tpu.memory_space<vmem>>, vector<16x32xf32>
    %c0_1 = arith.constant 0 : index
    %c0_2 = arith.constant 0 : index
    %1 = vector.load %arg1[%c0_1, %c0_2] : memref<32x96xf32, #tpu.memory_space<vmem>>, vector<32x96xf32>
    %cst = arith.constant dense<0.000000e+00> : vector<16x96xf32>
    %2 = tpu.matmul %0, %1, %cst {dimension_numbers = #tpu.dot_dimension_numbers<[1], [0], [0], [1], [0, 0, 1, 1], [], []>} : vector<16x32xf32>, vector<32x96xf32>, vector<16x96xf32> -> vector<16x96xf32>
    %c0_3 = arith.constant 0 : index
    %c0_4 = arith.constant 0 : index
    %3 = vector.load %arg2[%c0_3, %c0_4] : memref<1x96xf32, #tpu.memory_space<vmem>>, vector<1x96xf32>
    %4 = vector.broadcast %3 : vector<1x96xf32> to vector<16x96xf32>
    %5 = arith.addf %2, %4 : vector<16x96xf32>
    %c0_5 = arith.constant 0 : index
    %c0_6 = arith.constant 0 : index
    %6 = vector.load %arg3[%c0_5, %c0_6] : memref<16x48xf32, #tpu.memory_space<vmem>>, vector<16x48xf32>
    %c0_7 = arith.constant 0 : index
    %c0_8 = arith.constant 0 : index
    %7 = vector.load %arg4[%c0_7, %c0_8] : memref<16x48xf32, #tpu.memory_space<vmem>>, vector<16x48xf32>
    %c0_9 = arith.constant 0 : index
    %c0_10 = arith.constant 0 : index
    %8 = vector.load %arg5[%c0_9, %c0_10] : memref<1x16xf32, #tpu.memory_space<vmem>>, vector<1x16xf32>
    %9 = vector.shape_cast %8 : vector<1x16xf32> to vector<1x16xf32>
    %10 = vector.broadcast %9 : vector<1x16xf32> to vector<2x16xf32>
    %c0_11 = arith.constant 0 : index
    %c0_12 = arith.constant 0 : index
    %11 = vector.load %arg6[%c0_11, %c0_12] : memref<1x16xf32, #tpu.memory_space<vmem>>, vector<1x16xf32>
    %12 = vector.shape_cast %11 : vector<1x16xf32> to vector<1x16xf32>
    %13 = vector.broadcast %12 : vector<1x16xf32> to vector<2x16xf32>
    %cst_13 = arith.constant 0.000000e+00 : f32
    %14 = vector.broadcast %cst_13 : f32 to vector<2x16xf32>
    %cst_14 = arith.constant 0.000000e+00 : f32
    %15 = vector.broadcast %cst_14 : f32 to vector<2x16xf32>
    %16 = vector.extract_strided_slice %5 {offsets = [0, 0], sizes = [2, 48], strides = [1, 1]} : vector<16x96xf32> to vector<2x48xf32>
    %17 = vector.extract_strided_slice %5 {offsets = [14, 48], sizes = [2, 48], strides = [1, 1]} : vector<16x96xf32> to vector<2x48xf32>
    %cst_15 = arith.constant dense<0.000000e+00> : vector<2x48xf32>
    %18 = tpu.matmul %14, %6, %cst_15 {dimension_numbers = #tpu.dot_dimension_numbers<[1], [0], [0], [1], [0, 0, 1, 1], [], []>} : vector<2x16xf32>, vector<16x48xf32>, vector<2x48xf32> -> vector<2x48xf32>
    %cst_16 = arith.constant dense<0.000000e+00> : vector<2x48xf32>
    %19 = tpu.matmul %15, %7, %cst_16 {dimension_numbers = #tpu.dot_dimension_numbers<[1], [0], [0], [1], [0, 0, 1, 1], [], []>} : vector<2x16xf32>, vector<16x48xf32>, vector<2x48xf32> -> vector<2x48xf32>
    %20 = vector.extract_strided_slice %16 {offsets = [0, 0], sizes = [2, 32], strides = [1, 1]} : vector<2x48xf32> to vector<2x32xf32>
    %21 = vector.extract_strided_slice %18 {offsets = [0, 0], sizes = [2, 32], strides = [1, 1]} : vector<2x48xf32> to vector<2x32xf32>
    %22 = arith.addf %20, %21 : vector<2x32xf32>
    %23 = arith.negf %22 : vector<2x32xf32>
    %24 = math.exp %23 : vector<2x32xf32>
    %cst_17 = arith.constant 1.000000e+00 : f32
    %25 = vector.broadcast %cst_17 : f32 to vector<2x32xf32>
    %26 = arith.addf %25, %24 : vector<2x32xf32>
    %27 = arith.divf %25, %26 : vector<2x32xf32>
    %28 = vector.extract_strided_slice %17 {offsets = [0, 0], sizes = [2, 32], strides = [1, 1]} : vector<2x48xf32> to vector<2x32xf32>
    %29 = vector.extract_strided_slice %19 {offsets = [0, 0], sizes = [2, 32], strides = [1, 1]} : vector<2x48xf32> to vector<2x32xf32>
    %30 = arith.addf %28, %29 : vector<2x32xf32>
    %31 = arith.negf %30 : vector<2x32xf32>
    %32 = math.exp %31 : vector<2x32xf32>
    %cst_18 = arith.constant 1.000000e+00 : f32
    %33 = vector.broadcast %cst_18 : f32 to vector<2x32xf32>
    %34 = arith.addf %33, %32 : vector<2x32xf32>
    %35 = arith.divf %33, %34 : vector<2x32xf32>
    %36 = vector.extract_strided_slice %27 {offsets = [0, 0], sizes = [2, 16], strides = [1, 1]} : vector<2x32xf32> to vector<2x16xf32>
    %37 = vector.extract_strided_slice %27 {offsets = [0, 16], sizes = [2, 16], strides = [1, 1]} : vector<2x32xf32> to vector<2x16xf32>
    %38 = vector.extract_strided_slice %35 {offsets = [0, 0], sizes = [2, 16], strides = [1, 1]} : vector<2x32xf32> to vector<2x16xf32>
    %39 = vector.extract_strided_slice %35 {offsets = [0, 16], sizes = [2, 16], strides = [1, 1]} : vector<2x32xf32> to vector<2x16xf32>
    %40 = vector.extract_strided_slice %16 {offsets = [0, 32], sizes = [2, 16], strides = [1, 1]} : vector<2x48xf32> to vector<2x16xf32>
    %41 = vector.extract_strided_slice %18 {offsets = [0, 32], sizes = [2, 16], strides = [1, 1]} : vector<2x48xf32> to vector<2x16xf32>
    %42 = arith.addf %41, %10 : vector<2x16xf32>
    %43 = arith.mulf %36, %42 : vector<2x16xf32>
    %44 = arith.addf %40, %43 : vector<2x16xf32>
    %45 = math.tanh %44 : vector<2x16xf32>
    %46 = vector.extract_strided_slice %17 {offsets = [0, 32], sizes = [2, 16], strides = [1, 1]} : vector<2x48xf32> to vector<2x16xf32>
    %47 = vector.extract_strided_slice %19 {offsets = [0, 32], sizes = [2, 16], strides = [1, 1]} : vector<2x48xf32> to vector<2x16xf32>
    %48 = arith.addf %47, %13 : vector<2x16xf32>
    %49 = arith.mulf %38, %48 : vector<2x16xf32>
    %50 = arith.addf %46, %49 : vector<2x16xf32>
    %51 = math.tanh %50 : vector<2x16xf32>
    %cst_19 = arith.constant 1.000000e+00 : f32
    %52 = vector.broadcast %cst_19 : f32 to vector<2x16xf32>
    %53 = arith.subf %52, %37 : vector<2x16xf32>
    %54 = arith.mulf %53, %45 : vector<2x16xf32>
    %55 = arith.mulf %37, %14 : vector<2x16xf32>
    %56 = arith.addf %54, %55 : vector<2x16xf32>
    %cst_20 = arith.constant 1.000000e+00 : f32
    %57 = vector.broadcast %cst_20 : f32 to vector<2x16xf32>
    %58 = arith.subf %57, %39 : vector<2x16xf32>
    %59 = arith.mulf %58, %51 : vector<2x16xf32>
    %60 = arith.mulf %39, %15 : vector<2x16xf32>
    %61 = arith.addf %59, %60 : vector<2x16xf32>
    %62 = vector.extract_strided_slice %5 {offsets = [2, 0], sizes = [2, 48], strides = [1, 1]} : vector<16x96xf32> to vector<2x48xf32>
    %63 = vector.extract_strided_slice %5 {offsets = [12, 48], sizes = [2, 48], strides = [1, 1]} : vector<16x96xf32> to vector<2x48xf32>
    %cst_21 = arith.constant dense<0.000000e+00> : vector<2x48xf32>
    %64 = tpu.matmul %56, %6, %cst_21 {dimension_numbers = #tpu.dot_dimension_numbers<[1], [0], [0], [1], [0, 0, 1, 1], [], []>} : vector<2x16xf32>, vector<16x48xf32>, vector<2x48xf32> -> vector<2x48xf32>
    %cst_22 = arith.constant dense<0.000000e+00> : vector<2x48xf32>
    %65 = tpu.matmul %61, %7, %cst_22 {dimension_numbers = #tpu.dot_dimension_numbers<[1], [0], [0], [1], [0, 0, 1, 1], [], []>} : vector<2x16xf32>, vector<16x48xf32>, vector<2x48xf32> -> vector<2x48xf32>
    %66 = vector.extract_strided_slice %62 {offsets = [0, 0], sizes = [2, 32], strides = [1, 1]} : vector<2x48xf32> to vector<2x32xf32>
    %67 = vector.extract_strided_slice %64 {offsets = [0, 0], sizes = [2, 32], strides = [1, 1]} : vector<2x48xf32> to vector<2x32xf32>
    %68 = arith.addf %66, %67 : vector<2x32xf32>
    %69 = arith.negf %68 : vector<2x32xf32>
    %70 = math.exp %69 : vector<2x32xf32>
    %cst_23 = arith.constant 1.000000e+00 : f32
    %71 = vector.broadcast %cst_23 : f32 to vector<2x32xf32>
    %72 = arith.addf %71, %70 : vector<2x32xf32>
    %73 = arith.divf %71, %72 : vector<2x32xf32>
    %74 = vector.extract_strided_slice %63 {offsets = [0, 0], sizes = [2, 32], strides = [1, 1]} : vector<2x48xf32> to vector<2x32xf32>
    %75 = vector.extract_strided_slice %65 {offsets = [0, 0], sizes = [2, 32], strides = [1, 1]} : vector<2x48xf32> to vector<2x32xf32>
    %76 = arith.addf %74, %75 : vector<2x32xf32>
    %77 = arith.negf %76 : vector<2x32xf32>
    %78 = math.exp %77 : vector<2x32xf32>
    %cst_24 = arith.constant 1.000000e+00 : f32
    %79 = vector.broadcast %cst_24 : f32 to vector<2x32xf32>
    %80 = arith.addf %79, %78 : vector<2x32xf32>
    %81 = arith.divf %79, %80 : vector<2x32xf32>
    %82 = vector.extract_strided_slice %73 {offsets = [0, 0], sizes = [2, 16], strides = [1, 1]} : vector<2x32xf32> to vector<2x16xf32>
    %83 = vector.extract_strided_slice %73 {offsets = [0, 16], sizes = [2, 16], strides = [1, 1]} : vector<2x32xf32> to vector<2x16xf32>
    %84 = vector.extract_strided_slice %81 {offsets = [0, 0], sizes = [2, 16], strides = [1, 1]} : vector<2x32xf32> to vector<2x16xf32>
    %85 = vector.extract_strided_slice %81 {offsets = [0, 16], sizes = [2, 16], strides = [1, 1]} : vector<2x32xf32> to vector<2x16xf32>
    %86 = vector.extract_strided_slice %62 {offsets = [0, 32], sizes = [2, 16], strides = [1, 1]} : vector<2x48xf32> to vector<2x16xf32>
    %87 = vector.extract_strided_slice %64 {offsets = [0, 32], sizes = [2, 16], strides = [1, 1]} : vector<2x48xf32> to vector<2x16xf32>
    %88 = arith.addf %87, %10 : vector<2x16xf32>
    %89 = arith.mulf %82, %88 : vector<2x16xf32>
    %90 = arith.addf %86, %89 : vector<2x16xf32>
    %91 = math.tanh %90 : vector<2x16xf32>
    %92 = vector.extract_strided_slice %63 {offsets = [0, 32], sizes = [2, 16], strides = [1, 1]} : vector<2x48xf32> to vector<2x16xf32>
    %93 = vector.extract_strided_slice %65 {offsets = [0, 32], sizes = [2, 16], strides = [1, 1]} : vector<2x48xf32> to vector<2x16xf32>
    %94 = arith.addf %93, %13 : vector<2x16xf32>
    %95 = arith.mulf %84, %94 : vector<2x16xf32>
    %96 = arith.addf %92, %95 : vector<2x16xf32>
    %97 = math.tanh %96 : vector<2x16xf32>
    %cst_25 = arith.constant 1.000000e+00 : f32
    %98 = vector.broadcast %cst_25 : f32 to vector<2x16xf32>
    %99 = arith.subf %98, %83 : vector<2x16xf32>
    %100 = arith.mulf %99, %91 : vector<2x16xf32>
    %101 = arith.mulf %83, %56 : vector<2x16xf32>
    %102 = arith.addf %100, %101 : vector<2x16xf32>
    %cst_26 = arith.constant 1.000000e+00 : f32
    %103 = vector.broadcast %cst_26 : f32 to vector<2x16xf32>
    %104 = arith.subf %103, %85 : vector<2x16xf32>
    %105 = arith.mulf %104, %97 : vector<2x16xf32>
    %106 = arith.mulf %85, %61 : vector<2x16xf32>
    %107 = arith.addf %105, %106 : vector<2x16xf32>
    %108 = vector.extract_strided_slice %5 {offsets = [4, 0], sizes = [2, 48], strides = [1, 1]} : vector<16x96xf32> to vector<2x48xf32>
    %109 = vector.extract_strided_slice %5 {offsets = [10, 48], sizes = [2, 48], strides = [1, 1]} : vector<16x96xf32> to vector<2x48xf32>
    %cst_27 = arith.constant dense<0.000000e+00> : vector<2x48xf32>
    %110 = tpu.matmul %102, %6, %cst_27 {dimension_numbers = #tpu.dot_dimension_numbers<[1], [0], [0], [1], [0, 0, 1, 1], [], []>} : vector<2x16xf32>, vector<16x48xf32>, vector<2x48xf32> -> vector<2x48xf32>
    %cst_28 = arith.constant dense<0.000000e+00> : vector<2x48xf32>
    %111 = tpu.matmul %107, %7, %cst_28 {dimension_numbers = #tpu.dot_dimension_numbers<[1], [0], [0], [1], [0, 0, 1, 1], [], []>} : vector<2x16xf32>, vector<16x48xf32>, vector<2x48xf32> -> vector<2x48xf32>
    %112 = vector.extract_strided_slice %108 {offsets = [0, 0], sizes = [2, 32], strides = [1, 1]} : vector<2x48xf32> to vector<2x32xf32>
    %113 = vector.extract_strided_slice %110 {offsets = [0, 0], sizes = [2, 32], strides = [1, 1]} : vector<2x48xf32> to vector<2x32xf32>
    %114 = arith.addf %112, %113 : vector<2x32xf32>
    %115 = arith.negf %114 : vector<2x32xf32>
    %116 = math.exp %115 : vector<2x32xf32>
    %cst_29 = arith.constant 1.000000e+00 : f32
    %117 = vector.broadcast %cst_29 : f32 to vector<2x32xf32>
    %118 = arith.addf %117, %116 : vector<2x32xf32>
    %119 = arith.divf %117, %118 : vector<2x32xf32>
    %120 = vector.extract_strided_slice %109 {offsets = [0, 0], sizes = [2, 32], strides = [1, 1]} : vector<2x48xf32> to vector<2x32xf32>
    %121 = vector.extract_strided_slice %111 {offsets = [0, 0], sizes = [2, 32], strides = [1, 1]} : vector<2x48xf32> to vector<2x32xf32>
    %122 = arith.addf %120, %121 : vector<2x32xf32>
    %123 = arith.negf %122 : vector<2x32xf32>
    %124 = math.exp %123 : vector<2x32xf32>
    %cst_30 = arith.constant 1.000000e+00 : f32
    %125 = vector.broadcast %cst_30 : f32 to vector<2x32xf32>
    %126 = arith.addf %125, %124 : vector<2x32xf32>
    %127 = arith.divf %125, %126 : vector<2x32xf32>
    %128 = vector.extract_strided_slice %119 {offsets = [0, 0], sizes = [2, 16], strides = [1, 1]} : vector<2x32xf32> to vector<2x16xf32>
    %129 = vector.extract_strided_slice %119 {offsets = [0, 16], sizes = [2, 16], strides = [1, 1]} : vector<2x32xf32> to vector<2x16xf32>
    %130 = vector.extract_strided_slice %127 {offsets = [0, 0], sizes = [2, 16], strides = [1, 1]} : vector<2x32xf32> to vector<2x16xf32>
    %131 = vector.extract_strided_slice %127 {offsets = [0, 16], sizes = [2, 16], strides = [1, 1]} : vector<2x32xf32> to vector<2x16xf32>
    %132 = vector.extract_strided_slice %108 {offsets = [0, 32], sizes = [2, 16], strides = [1, 1]} : vector<2x48xf32> to vector<2x16xf32>
    %133 = vector.extract_strided_slice %110 {offsets = [0, 32], sizes = [2, 16], strides = [1, 1]} : vector<2x48xf32> to vector<2x16xf32>
    %134 = arith.addf %133, %10 : vector<2x16xf32>
    %135 = arith.mulf %128, %134 : vector<2x16xf32>
    %136 = arith.addf %132, %135 : vector<2x16xf32>
    %137 = math.tanh %136 : vector<2x16xf32>
    %138 = vector.extract_strided_slice %109 {offsets = [0, 32], sizes = [2, 16], strides = [1, 1]} : vector<2x48xf32> to vector<2x16xf32>
    %139 = vector.extract_strided_slice %111 {offsets = [0, 32], sizes = [2, 16], strides = [1, 1]} : vector<2x48xf32> to vector<2x16xf32>
    %140 = arith.addf %139, %13 : vector<2x16xf32>
    %141 = arith.mulf %130, %140 : vector<2x16xf32>
    %142 = arith.addf %138, %141 : vector<2x16xf32>
    %143 = math.tanh %142 : vector<2x16xf32>
    %cst_31 = arith.constant 1.000000e+00 : f32
    %144 = vector.broadcast %cst_31 : f32 to vector<2x16xf32>
    %145 = arith.subf %144, %129 : vector<2x16xf32>
    %146 = arith.mulf %145, %137 : vector<2x16xf32>
    %147 = arith.mulf %129, %102 : vector<2x16xf32>
    %148 = arith.addf %146, %147 : vector<2x16xf32>
    %cst_32 = arith.constant 1.000000e+00 : f32
    %149 = vector.broadcast %cst_32 : f32 to vector<2x16xf32>
    %150 = arith.subf %149, %131 : vector<2x16xf32>
    %151 = arith.mulf %150, %143 : vector<2x16xf32>
    %152 = arith.mulf %131, %107 : vector<2x16xf32>
    %153 = arith.addf %151, %152 : vector<2x16xf32>
    %154 = vector.extract_strided_slice %5 {offsets = [6, 0], sizes = [2, 48], strides = [1, 1]} : vector<16x96xf32> to vector<2x48xf32>
    %155 = vector.extract_strided_slice %5 {offsets = [8, 48], sizes = [2, 48], strides = [1, 1]} : vector<16x96xf32> to vector<2x48xf32>
    %cst_33 = arith.constant dense<0.000000e+00> : vector<2x48xf32>
    %156 = tpu.matmul %148, %6, %cst_33 {dimension_numbers = #tpu.dot_dimension_numbers<[1], [0], [0], [1], [0, 0, 1, 1], [], []>} : vector<2x16xf32>, vector<16x48xf32>, vector<2x48xf32> -> vector<2x48xf32>
    %cst_34 = arith.constant dense<0.000000e+00> : vector<2x48xf32>
    %157 = tpu.matmul %153, %7, %cst_34 {dimension_numbers = #tpu.dot_dimension_numbers<[1], [0], [0], [1], [0, 0, 1, 1], [], []>} : vector<2x16xf32>, vector<16x48xf32>, vector<2x48xf32> -> vector<2x48xf32>
    %158 = vector.extract_strided_slice %154 {offsets = [0, 0], sizes = [2, 32], strides = [1, 1]} : vector<2x48xf32> to vector<2x32xf32>
    %159 = vector.extract_strided_slice %156 {offsets = [0, 0], sizes = [2, 32], strides = [1, 1]} : vector<2x48xf32> to vector<2x32xf32>
    %160 = arith.addf %158, %159 : vector<2x32xf32>
    %161 = arith.negf %160 : vector<2x32xf32>
    %162 = math.exp %161 : vector<2x32xf32>
    %cst_35 = arith.constant 1.000000e+00 : f32
    %163 = vector.broadcast %cst_35 : f32 to vector<2x32xf32>
    %164 = arith.addf %163, %162 : vector<2x32xf32>
    %165 = arith.divf %163, %164 : vector<2x32xf32>
    %166 = vector.extract_strided_slice %155 {offsets = [0, 0], sizes = [2, 32], strides = [1, 1]} : vector<2x48xf32> to vector<2x32xf32>
    %167 = vector.extract_strided_slice %157 {offsets = [0, 0], sizes = [2, 32], strides = [1, 1]} : vector<2x48xf32> to vector<2x32xf32>
    %168 = arith.addf %166, %167 : vector<2x32xf32>
    %169 = arith.negf %168 : vector<2x32xf32>
    %170 = math.exp %169 : vector<2x32xf32>
    %cst_36 = arith.constant 1.000000e+00 : f32
    %171 = vector.broadcast %cst_36 : f32 to vector<2x32xf32>
    %172 = arith.addf %171, %170 : vector<2x32xf32>
    %173 = arith.divf %171, %172 : vector<2x32xf32>
    %174 = vector.extract_strided_slice %165 {offsets = [0, 0], sizes = [2, 16], strides = [1, 1]} : vector<2x32xf32> to vector<2x16xf32>
    %175 = vector.extract_strided_slice %165 {offsets = [0, 16], sizes = [2, 16], strides = [1, 1]} : vector<2x32xf32> to vector<2x16xf32>
    %176 = vector.extract_strided_slice %173 {offsets = [0, 0], sizes = [2, 16], strides = [1, 1]} : vector<2x32xf32> to vector<2x16xf32>
    %177 = vector.extract_strided_slice %173 {offsets = [0, 16], sizes = [2, 16], strides = [1, 1]} : vector<2x32xf32> to vector<2x16xf32>
    %178 = vector.extract_strided_slice %154 {offsets = [0, 32], sizes = [2, 16], strides = [1, 1]} : vector<2x48xf32> to vector<2x16xf32>
    %179 = vector.extract_strided_slice %156 {offsets = [0, 32], sizes = [2, 16], strides = [1, 1]} : vector<2x48xf32> to vector<2x16xf32>
    %180 = arith.addf %179, %10 : vector<2x16xf32>
    %181 = arith.mulf %174, %180 : vector<2x16xf32>
    %182 = arith.addf %178, %181 : vector<2x16xf32>
    %183 = math.tanh %182 : vector<2x16xf32>
    %184 = vector.extract_strided_slice %155 {offsets = [0, 32], sizes = [2, 16], strides = [1, 1]} : vector<2x48xf32> to vector<2x16xf32>
    %185 = vector.extract_strided_slice %157 {offsets = [0, 32], sizes = [2, 16], strides = [1, 1]} : vector<2x48xf32> to vector<2x16xf32>
    %186 = arith.addf %185, %13 : vector<2x16xf32>
    %187 = arith.mulf %176, %186 : vector<2x16xf32>
    %188 = arith.addf %184, %187 : vector<2x16xf32>
    %189 = math.tanh %188 : vector<2x16xf32>
    %cst_37 = arith.constant 1.000000e+00 : f32
    %190 = vector.broadcast %cst_37 : f32 to vector<2x16xf32>
    %191 = arith.subf %190, %175 : vector<2x16xf32>
    %192 = arith.mulf %191, %183 : vector<2x16xf32>
    %193 = arith.mulf %175, %148 : vector<2x16xf32>
    %194 = arith.addf %192, %193 : vector<2x16xf32>
    %cst_38 = arith.constant 1.000000e+00 : f32
    %195 = vector.broadcast %cst_38 : f32 to vector<2x16xf32>
    %196 = arith.subf %195, %177 : vector<2x16xf32>
    %197 = arith.mulf %196, %189 : vector<2x16xf32>
    %198 = arith.mulf %177, %153 : vector<2x16xf32>
    %199 = arith.addf %197, %198 : vector<2x16xf32>
    %200 = vector.extract_strided_slice %5 {offsets = [8, 0], sizes = [2, 48], strides = [1, 1]} : vector<16x96xf32> to vector<2x48xf32>
    %201 = vector.extract_strided_slice %5 {offsets = [6, 48], sizes = [2, 48], strides = [1, 1]} : vector<16x96xf32> to vector<2x48xf32>
    %cst_39 = arith.constant dense<0.000000e+00> : vector<2x48xf32>
    %202 = tpu.matmul %194, %6, %cst_39 {dimension_numbers = #tpu.dot_dimension_numbers<[1], [0], [0], [1], [0, 0, 1, 1], [], []>} : vector<2x16xf32>, vector<16x48xf32>, vector<2x48xf32> -> vector<2x48xf32>
    %cst_40 = arith.constant dense<0.000000e+00> : vector<2x48xf32>
    %203 = tpu.matmul %199, %7, %cst_40 {dimension_numbers = #tpu.dot_dimension_numbers<[1], [0], [0], [1], [0, 0, 1, 1], [], []>} : vector<2x16xf32>, vector<16x48xf32>, vector<2x48xf32> -> vector<2x48xf32>
    %204 = vector.extract_strided_slice %200 {offsets = [0, 0], sizes = [2, 32], strides = [1, 1]} : vector<2x48xf32> to vector<2x32xf32>
    %205 = vector.extract_strided_slice %202 {offsets = [0, 0], sizes = [2, 32], strides = [1, 1]} : vector<2x48xf32> to vector<2x32xf32>
    %206 = arith.addf %204, %205 : vector<2x32xf32>
    %207 = arith.negf %206 : vector<2x32xf32>
    %208 = math.exp %207 : vector<2x32xf32>
    %cst_41 = arith.constant 1.000000e+00 : f32
    %209 = vector.broadcast %cst_41 : f32 to vector<2x32xf32>
    %210 = arith.addf %209, %208 : vector<2x32xf32>
    %211 = arith.divf %209, %210 : vector<2x32xf32>
    %212 = vector.extract_strided_slice %201 {offsets = [0, 0], sizes = [2, 32], strides = [1, 1]} : vector<2x48xf32> to vector<2x32xf32>
    %213 = vector.extract_strided_slice %203 {offsets = [0, 0], sizes = [2, 32], strides = [1, 1]} : vector<2x48xf32> to vector<2x32xf32>
    %214 = arith.addf %212, %213 : vector<2x32xf32>
    %215 = arith.negf %214 : vector<2x32xf32>
    %216 = math.exp %215 : vector<2x32xf32>
    %cst_42 = arith.constant 1.000000e+00 : f32
    %217 = vector.broadcast %cst_42 : f32 to vector<2x32xf32>
    %218 = arith.addf %217, %216 : vector<2x32xf32>
    %219 = arith.divf %217, %218 : vector<2x32xf32>
    %220 = vector.extract_strided_slice %211 {offsets = [0, 0], sizes = [2, 16], strides = [1, 1]} : vector<2x32xf32> to vector<2x16xf32>
    %221 = vector.extract_strided_slice %211 {offsets = [0, 16], sizes = [2, 16], strides = [1, 1]} : vector<2x32xf32> to vector<2x16xf32>
    %222 = vector.extract_strided_slice %219 {offsets = [0, 0], sizes = [2, 16], strides = [1, 1]} : vector<2x32xf32> to vector<2x16xf32>
    %223 = vector.extract_strided_slice %219 {offsets = [0, 16], sizes = [2, 16], strides = [1, 1]} : vector<2x32xf32> to vector<2x16xf32>
    %224 = vector.extract_strided_slice %200 {offsets = [0, 32], sizes = [2, 16], strides = [1, 1]} : vector<2x48xf32> to vector<2x16xf32>
    %225 = vector.extract_strided_slice %202 {offsets = [0, 32], sizes = [2, 16], strides = [1, 1]} : vector<2x48xf32> to vector<2x16xf32>
    %226 = arith.addf %225, %10 : vector<2x16xf32>
    %227 = arith.mulf %220, %226 : vector<2x16xf32>
    %228 = arith.addf %224, %227 : vector<2x16xf32>
    %229 = math.tanh %228 : vector<2x16xf32>
    %230 = vector.extract_strided_slice %201 {offsets = [0, 32], sizes = [2, 16], strides = [1, 1]} : vector<2x48xf32> to vector<2x16xf32>
    %231 = vector.extract_strided_slice %203 {offsets = [0, 32], sizes = [2, 16], strides = [1, 1]} : vector<2x48xf32> to vector<2x16xf32>
    %232 = arith.addf %231, %13 : vector<2x16xf32>
    %233 = arith.mulf %222, %232 : vector<2x16xf32>
    %234 = arith.addf %230, %233 : vector<2x16xf32>
    %235 = math.tanh %234 : vector<2x16xf32>
    %cst_43 = arith.constant 1.000000e+00 : f32
    %236 = vector.broadcast %cst_43 : f32 to vector<2x16xf32>
    %237 = arith.subf %236, %221 : vector<2x16xf32>
    %238 = arith.mulf %237, %229 : vector<2x16xf32>
    %239 = arith.mulf %221, %194 : vector<2x16xf32>
    %240 = arith.addf %238, %239 : vector<2x16xf32>
    %cst_44 = arith.constant 1.000000e+00 : f32
    %241 = vector.broadcast %cst_44 : f32 to vector<2x16xf32>
    %242 = arith.subf %241, %223 : vector<2x16xf32>
    %243 = arith.mulf %242, %235 : vector<2x16xf32>
    %244 = arith.mulf %223, %199 : vector<2x16xf32>
    %245 = arith.addf %243, %244 : vector<2x16xf32>
    %246 = vector.extract_strided_slice %5 {offsets = [10, 0], sizes = [2, 48], strides = [1, 1]} : vector<16x96xf32> to vector<2x48xf32>
    %247 = vector.extract_strided_slice %5 {offsets = [4, 48], sizes = [2, 48], strides = [1, 1]} : vector<16x96xf32> to vector<2x48xf32>
    %cst_45 = arith.constant dense<0.000000e+00> : vector<2x48xf32>
    %248 = tpu.matmul %240, %6, %cst_45 {dimension_numbers = #tpu.dot_dimension_numbers<[1], [0], [0], [1], [0, 0, 1, 1], [], []>} : vector<2x16xf32>, vector<16x48xf32>, vector<2x48xf32> -> vector<2x48xf32>
    %cst_46 = arith.constant dense<0.000000e+00> : vector<2x48xf32>
    %249 = tpu.matmul %245, %7, %cst_46 {dimension_numbers = #tpu.dot_dimension_numbers<[1], [0], [0], [1], [0, 0, 1, 1], [], []>} : vector<2x16xf32>, vector<16x48xf32>, vector<2x48xf32> -> vector<2x48xf32>
    %250 = vector.extract_strided_slice %246 {offsets = [0, 0], sizes = [2, 32], strides = [1, 1]} : vector<2x48xf32> to vector<2x32xf32>
    %251 = vector.extract_strided_slice %248 {offsets = [0, 0], sizes = [2, 32], strides = [1, 1]} : vector<2x48xf32> to vector<2x32xf32>
    %252 = arith.addf %250, %251 : vector<2x32xf32>
    %253 = arith.negf %252 : vector<2x32xf32>
    %254 = math.exp %253 : vector<2x32xf32>
    %cst_47 = arith.constant 1.000000e+00 : f32
    %255 = vector.broadcast %cst_47 : f32 to vector<2x32xf32>
    %256 = arith.addf %255, %254 : vector<2x32xf32>
    %257 = arith.divf %255, %256 : vector<2x32xf32>
    %258 = vector.extract_strided_slice %247 {offsets = [0, 0], sizes = [2, 32], strides = [1, 1]} : vector<2x48xf32> to vector<2x32xf32>
    %259 = vector.extract_strided_slice %249 {offsets = [0, 0], sizes = [2, 32], strides = [1, 1]} : vector<2x48xf32> to vector<2x32xf32>
    %260 = arith.addf %258, %259 : vector<2x32xf32>
    %261 = arith.negf %260 : vector<2x32xf32>
    %262 = math.exp %261 : vector<2x32xf32>
    %cst_48 = arith.constant 1.000000e+00 : f32
    %263 = vector.broadcast %cst_48 : f32 to vector<2x32xf32>
    %264 = arith.addf %263, %262 : vector<2x32xf32>
    %265 = arith.divf %263, %264 : vector<2x32xf32>
    %266 = vector.extract_strided_slice %257 {offsets = [0, 0], sizes = [2, 16], strides = [1, 1]} : vector<2x32xf32> to vector<2x16xf32>
    %267 = vector.extract_strided_slice %257 {offsets = [0, 16], sizes = [2, 16], strides = [1, 1]} : vector<2x32xf32> to vector<2x16xf32>
    %268 = vector.extract_strided_slice %265 {offsets = [0, 0], sizes = [2, 16], strides = [1, 1]} : vector<2x32xf32> to vector<2x16xf32>
    %269 = vector.extract_strided_slice %265 {offsets = [0, 16], sizes = [2, 16], strides = [1, 1]} : vector<2x32xf32> to vector<2x16xf32>
    %270 = vector.extract_strided_slice %246 {offsets = [0, 32], sizes = [2, 16], strides = [1, 1]} : vector<2x48xf32> to vector<2x16xf32>
    %271 = vector.extract_strided_slice %248 {offsets = [0, 32], sizes = [2, 16], strides = [1, 1]} : vector<2x48xf32> to vector<2x16xf32>
    %272 = arith.addf %271, %10 : vector<2x16xf32>
    %273 = arith.mulf %266, %272 : vector<2x16xf32>
    %274 = arith.addf %270, %273 : vector<2x16xf32>
    %275 = math.tanh %274 : vector<2x16xf32>
    %276 = vector.extract_strided_slice %247 {offsets = [0, 32], sizes = [2, 16], strides = [1, 1]} : vector<2x48xf32> to vector<2x16xf32>
    %277 = vector.extract_strided_slice %249 {offsets = [0, 32], sizes = [2, 16], strides = [1, 1]} : vector<2x48xf32> to vector<2x16xf32>
    %278 = arith.addf %277, %13 : vector<2x16xf32>
    %279 = arith.mulf %268, %278 : vector<2x16xf32>
    %280 = arith.addf %276, %279 : vector<2x16xf32>
    %281 = math.tanh %280 : vector<2x16xf32>
    %cst_49 = arith.constant 1.000000e+00 : f32
    %282 = vector.broadcast %cst_49 : f32 to vector<2x16xf32>
    %283 = arith.subf %282, %267 : vector<2x16xf32>
    %284 = arith.mulf %283, %275 : vector<2x16xf32>
    %285 = arith.mulf %267, %240 : vector<2x16xf32>
    %286 = arith.addf %284, %285 : vector<2x16xf32>
    %cst_50 = arith.constant 1.000000e+00 : f32
    %287 = vector.broadcast %cst_50 : f32 to vector<2x16xf32>
    %288 = arith.subf %287, %269 : vector<2x16xf32>
    %289 = arith.mulf %288, %281 : vector<2x16xf32>
    %290 = arith.mulf %269, %245 : vector<2x16xf32>
    %291 = arith.addf %289, %290 : vector<2x16xf32>
    %292 = vector.extract_strided_slice %5 {offsets = [12, 0], sizes = [2, 48], strides = [1, 1]} : vector<16x96xf32> to vector<2x48xf32>
    %293 = vector.extract_strided_slice %5 {offsets = [2, 48], sizes = [2, 48], strides = [1, 1]} : vector<16x96xf32> to vector<2x48xf32>
    %cst_51 = arith.constant dense<0.000000e+00> : vector<2x48xf32>
    %294 = tpu.matmul %286, %6, %cst_51 {dimension_numbers = #tpu.dot_dimension_numbers<[1], [0], [0], [1], [0, 0, 1, 1], [], []>} : vector<2x16xf32>, vector<16x48xf32>, vector<2x48xf32> -> vector<2x48xf32>
    %cst_52 = arith.constant dense<0.000000e+00> : vector<2x48xf32>
    %295 = tpu.matmul %291, %7, %cst_52 {dimension_numbers = #tpu.dot_dimension_numbers<[1], [0], [0], [1], [0, 0, 1, 1], [], []>} : vector<2x16xf32>, vector<16x48xf32>, vector<2x48xf32> -> vector<2x48xf32>
    %296 = vector.extract_strided_slice %292 {offsets = [0, 0], sizes = [2, 32], strides = [1, 1]} : vector<2x48xf32> to vector<2x32xf32>
    %297 = vector.extract_strided_slice %294 {offsets = [0, 0], sizes = [2, 32], strides = [1, 1]} : vector<2x48xf32> to vector<2x32xf32>
    %298 = arith.addf %296, %297 : vector<2x32xf32>
    %299 = arith.negf %298 : vector<2x32xf32>
    %300 = math.exp %299 : vector<2x32xf32>
    %cst_53 = arith.constant 1.000000e+00 : f32
    %301 = vector.broadcast %cst_53 : f32 to vector<2x32xf32>
    %302 = arith.addf %301, %300 : vector<2x32xf32>
    %303 = arith.divf %301, %302 : vector<2x32xf32>
    %304 = vector.extract_strided_slice %293 {offsets = [0, 0], sizes = [2, 32], strides = [1, 1]} : vector<2x48xf32> to vector<2x32xf32>
    %305 = vector.extract_strided_slice %295 {offsets = [0, 0], sizes = [2, 32], strides = [1, 1]} : vector<2x48xf32> to vector<2x32xf32>
    %306 = arith.addf %304, %305 : vector<2x32xf32>
    %307 = arith.negf %306 : vector<2x32xf32>
    %308 = math.exp %307 : vector<2x32xf32>
    %cst_54 = arith.constant 1.000000e+00 : f32
    %309 = vector.broadcast %cst_54 : f32 to vector<2x32xf32>
    %310 = arith.addf %309, %308 : vector<2x32xf32>
    %311 = arith.divf %309, %310 : vector<2x32xf32>
    %312 = vector.extract_strided_slice %303 {offsets = [0, 0], sizes = [2, 16], strides = [1, 1]} : vector<2x32xf32> to vector<2x16xf32>
    %313 = vector.extract_strided_slice %303 {offsets = [0, 16], sizes = [2, 16], strides = [1, 1]} : vector<2x32xf32> to vector<2x16xf32>
    %314 = vector.extract_strided_slice %311 {offsets = [0, 0], sizes = [2, 16], strides = [1, 1]} : vector<2x32xf32> to vector<2x16xf32>
    %315 = vector.extract_strided_slice %311 {offsets = [0, 16], sizes = [2, 16], strides = [1, 1]} : vector<2x32xf32> to vector<2x16xf32>
    %316 = vector.extract_strided_slice %292 {offsets = [0, 32], sizes = [2, 16], strides = [1, 1]} : vector<2x48xf32> to vector<2x16xf32>
    %317 = vector.extract_strided_slice %294 {offsets = [0, 32], sizes = [2, 16], strides = [1, 1]} : vector<2x48xf32> to vector<2x16xf32>
    %318 = arith.addf %317, %10 : vector<2x16xf32>
    %319 = arith.mulf %312, %318 : vector<2x16xf32>
    %320 = arith.addf %316, %319 : vector<2x16xf32>
    %321 = math.tanh %320 : vector<2x16xf32>
    %322 = vector.extract_strided_slice %293 {offsets = [0, 32], sizes = [2, 16], strides = [1, 1]} : vector<2x48xf32> to vector<2x16xf32>
    %323 = vector.extract_strided_slice %295 {offsets = [0, 32], sizes = [2, 16], strides = [1, 1]} : vector<2x48xf32> to vector<2x16xf32>
    %324 = arith.addf %323, %13 : vector<2x16xf32>
    %325 = arith.mulf %314, %324 : vector<2x16xf32>
    %326 = arith.addf %322, %325 : vector<2x16xf32>
    %327 = math.tanh %326 : vector<2x16xf32>
    %cst_55 = arith.constant 1.000000e+00 : f32
    %328 = vector.broadcast %cst_55 : f32 to vector<2x16xf32>
    %329 = arith.subf %328, %313 : vector<2x16xf32>
    %330 = arith.mulf %329, %321 : vector<2x16xf32>
    %331 = arith.mulf %313, %286 : vector<2x16xf32>
    %332 = arith.addf %330, %331 : vector<2x16xf32>
    %cst_56 = arith.constant 1.000000e+00 : f32
    %333 = vector.broadcast %cst_56 : f32 to vector<2x16xf32>
    %334 = arith.subf %333, %315 : vector<2x16xf32>
    %335 = arith.mulf %334, %327 : vector<2x16xf32>
    %336 = arith.mulf %315, %291 : vector<2x16xf32>
    %337 = arith.addf %335, %336 : vector<2x16xf32>
    %338 = vector.extract_strided_slice %5 {offsets = [14, 0], sizes = [2, 48], strides = [1, 1]} : vector<16x96xf32> to vector<2x48xf32>
    %339 = vector.extract_strided_slice %5 {offsets = [0, 48], sizes = [2, 48], strides = [1, 1]} : vector<16x96xf32> to vector<2x48xf32>
    %cst_57 = arith.constant dense<0.000000e+00> : vector<2x48xf32>
    %340 = tpu.matmul %332, %6, %cst_57 {dimension_numbers = #tpu.dot_dimension_numbers<[1], [0], [0], [1], [0, 0, 1, 1], [], []>} : vector<2x16xf32>, vector<16x48xf32>, vector<2x48xf32> -> vector<2x48xf32>
    %cst_58 = arith.constant dense<0.000000e+00> : vector<2x48xf32>
    %341 = tpu.matmul %337, %7, %cst_58 {dimension_numbers = #tpu.dot_dimension_numbers<[1], [0], [0], [1], [0, 0, 1, 1], [], []>} : vector<2x16xf32>, vector<16x48xf32>, vector<2x48xf32> -> vector<2x48xf32>
    %342 = vector.extract_strided_slice %338 {offsets = [0, 0], sizes = [2, 32], strides = [1, 1]} : vector<2x48xf32> to vector<2x32xf32>
    %343 = vector.extract_strided_slice %340 {offsets = [0, 0], sizes = [2, 32], strides = [1, 1]} : vector<2x48xf32> to vector<2x32xf32>
    %344 = arith.addf %342, %343 : vector<2x32xf32>
    %345 = arith.negf %344 : vector<2x32xf32>
    %346 = math.exp %345 : vector<2x32xf32>
    %cst_59 = arith.constant 1.000000e+00 : f32
    %347 = vector.broadcast %cst_59 : f32 to vector<2x32xf32>
    %348 = arith.addf %347, %346 : vector<2x32xf32>
    %349 = arith.divf %347, %348 : vector<2x32xf32>
    %350 = vector.extract_strided_slice %339 {offsets = [0, 0], sizes = [2, 32], strides = [1, 1]} : vector<2x48xf32> to vector<2x32xf32>
    %351 = vector.extract_strided_slice %341 {offsets = [0, 0], sizes = [2, 32], strides = [1, 1]} : vector<2x48xf32> to vector<2x32xf32>
    %352 = arith.addf %350, %351 : vector<2x32xf32>
    %353 = arith.negf %352 : vector<2x32xf32>
    %354 = math.exp %353 : vector<2x32xf32>
    %cst_60 = arith.constant 1.000000e+00 : f32
    %355 = vector.broadcast %cst_60 : f32 to vector<2x32xf32>
    %356 = arith.addf %355, %354 : vector<2x32xf32>
    %357 = arith.divf %355, %356 : vector<2x32xf32>
    %358 = vector.extract_strided_slice %349 {offsets = [0, 0], sizes = [2, 16], strides = [1, 1]} : vector<2x32xf32> to vector<2x16xf32>
    %359 = vector.extract_strided_slice %349 {offsets = [0, 16], sizes = [2, 16], strides = [1, 1]} : vector<2x32xf32> to vector<2x16xf32>
    %360 = vector.extract_strided_slice %357 {offsets = [0, 0], sizes = [2, 16], strides = [1, 1]} : vector<2x32xf32> to vector<2x16xf32>
    %361 = vector.extract_strided_slice %357 {offsets = [0, 16], sizes = [2, 16], strides = [1, 1]} : vector<2x32xf32> to vector<2x16xf32>
    %362 = vector.extract_strided_slice %338 {offsets = [0, 32], sizes = [2, 16], strides = [1, 1]} : vector<2x48xf32> to vector<2x16xf32>
    %363 = vector.extract_strided_slice %340 {offsets = [0, 32], sizes = [2, 16], strides = [1, 1]} : vector<2x48xf32> to vector<2x16xf32>
    %364 = arith.addf %363, %10 : vector<2x16xf32>
    %365 = arith.mulf %358, %364 : vector<2x16xf32>
    %366 = arith.addf %362, %365 : vector<2x16xf32>
    %367 = math.tanh %366 : vector<2x16xf32>
    %368 = vector.extract_strided_slice %339 {offsets = [0, 32], sizes = [2, 16], strides = [1, 1]} : vector<2x48xf32> to vector<2x16xf32>
    %369 = vector.extract_strided_slice %341 {offsets = [0, 32], sizes = [2, 16], strides = [1, 1]} : vector<2x48xf32> to vector<2x16xf32>
    %370 = arith.addf %369, %13 : vector<2x16xf32>
    %371 = arith.mulf %360, %370 : vector<2x16xf32>
    %372 = arith.addf %368, %371 : vector<2x16xf32>
    %373 = math.tanh %372 : vector<2x16xf32>
    %cst_61 = arith.constant 1.000000e+00 : f32
    %374 = vector.broadcast %cst_61 : f32 to vector<2x16xf32>
    %375 = arith.subf %374, %359 : vector<2x16xf32>
    %376 = arith.mulf %375, %367 : vector<2x16xf32>
    %377 = arith.mulf %359, %332 : vector<2x16xf32>
    %378 = arith.addf %376, %377 : vector<2x16xf32>
    %cst_62 = arith.constant 1.000000e+00 : f32
    %379 = vector.broadcast %cst_62 : f32 to vector<2x16xf32>
    %380 = arith.subf %379, %361 : vector<2x16xf32>
    %381 = arith.mulf %380, %373 : vector<2x16xf32>
    %382 = arith.mulf %361, %337 : vector<2x16xf32>
    %383 = arith.addf %381, %382 : vector<2x16xf32>
    %384 = tpu.concatenate %378, %383 in 1 : vector<2x16xf32>, vector<2x16xf32> -> vector<2x32xf32>
    %c0_63 = arith.constant 0 : index
    %c0_64 = arith.constant 0 : index
    %385 = vector.load %arg7[%c0_63, %c0_64] : memref<32x128xf32, #tpu.memory_space<vmem>>, vector<32x128xf32>
    %cst_65 = arith.constant dense<0.000000e+00> : vector<2x128xf32>
    %386 = tpu.matmul %384, %385, %cst_65 {dimension_numbers = #tpu.dot_dimension_numbers<[1], [0], [0], [1], [0, 0, 1, 1], [], []>} : vector<2x32xf32>, vector<32x128xf32>, vector<2x128xf32> -> vector<2x128xf32>
    %c0_66 = arith.constant 0 : index
    %c0_67 = arith.constant 0 : index
    %387 = vector.load %arg8[%c0_66, %c0_67] : memref<1x128xf32, #tpu.memory_space<vmem>>, vector<1x128xf32>
    %388 = vector.broadcast %387 : vector<1x128xf32> to vector<2x128xf32>
    %389 = arith.addf %386, %388 : vector<2x128xf32>
    %c0_68 = arith.constant 0 : index
    %c0_69 = arith.constant 0 : index
    %390 = vector.load %arg10[%c0_68, %c0_69] : memref<2x128xf32, #tpu.memory_space<vmem>>, vector<2x128xf32>
    tpu.vector_store %arg10[%c0_68, %c0_69], %389 {strides = array<i32>} : memref<2x128xf32, #tpu.memory_space<vmem>>, vector<2x128xf32>,
    %cst_70 = arith.constant dense<0xFF800000> : vector<2xf32>
    %391 = vector.multi_reduction <maximumf>, %389, %cst_70 [1] : vector<2x128xf32> to vector<2xf32>
    %392 = vector.shape_cast %391 : vector<2xf32> to vector<2x1xf32>
    %393 = vector.broadcast %392 : vector<2x1xf32> to vector<2x128xf32>
    %394 = arith.subf %389, %393 : vector<2x128xf32>
    %395 = math.exp %394 : vector<2x128xf32>
    %cst_71 = arith.constant dense<0.000000e+00> : vector<2xf32>
    %396 = vector.multi_reduction <add>, %395, %cst_71 [1] : vector<2x128xf32> to vector<2xf32>
    %397 = vector.shape_cast %396 : vector<2xf32> to vector<2x1xf32>
    %398 = math.log %397 : vector<2x1xf32>
    %399 = arith.addf %392, %398 : vector<2x1xf32>
    %400 = tpu.iota {dimensions = array<i32: 1>} : vector<2x128xi32>
    %c0_72 = arith.constant 0 : index
    %c0_73 = arith.constant 0 : index
    %401 = vector.load %arg9[%c0_72, %c0_73] : memref<2x1xi32, #tpu.memory_space<vmem>>, vector<2x1xi32>
    %402 = vector.broadcast %401 : vector<2x1xi32> to vector<2x128xi32>
    %403 = arith.cmpi eq, %400, %402 : vector<2x128xi32>
    %cst_74 = arith.constant 0.000000e+00 : f32
    %404 = vector.broadcast %cst_74 : f32 to vector<2x128xf32>
    %405 = arith.select %403, %389, %404 : vector<2x128xi1>, vector<2x128xf32>
    %cst_75 = arith.constant dense<0.000000e+00> : vector<2xf32>
    %406 = vector.multi_reduction <add>, %405, %cst_75 [1] : vector<2x128xf32> to vector<2xf32>
    %407 = vector.shape_cast %406 : vector<2xf32> to vector<2x1xf32>
    %408 = arith.subf %399, %407 : vector<2x1xf32>
    %409 = vector.shape_cast %408 : vector<2x1xf32> to vector<1x2x1xf32>
    %cst_76 = arith.constant dense<0.000000e+00> : vector<1xf32>
    %410 = vector.multi_reduction <add>, %409, %cst_76 [1, 2] : vector<1x2x1xf32> to vector<1xf32>
    %411 = vector.shape_cast %410 : vector<1xf32> to vector<1x1x1xf32>
    %412 = vector.extract %411[0, 0, 0] : f32 from vector<1x1x1xf32>
    %cst_77 = arith.constant 2.000000e+00 : f32
    %413 = arith.divf %412, %cst_77 : f32
    %c0_78 = arith.constant 0 : index
    %c0_79 = arith.constant 0 : index
    %414 = memref.load %arg11[%c0_78, %c0_79] : memref<1x1xf32, #tpu.memory_space<smem>>
    memref.store %413, %arg11[%c0_78, %c0_79] : memref<1x1xf32, #tpu.memory_space<smem>>
    return
  }
}

</mosaic_0001>

<llo_original>
// kernel: tpu_custom_call.1
$region0: #{tpu_custom_call.1}
  #allocation0 [shape = 'u32[]', space=smem, size = 0x4, offset = 0x4, fixed_abs, tag = 'smem constant byte address 0x4 - core index']
  #allocation1 [shape = 'u32[144,128]{1,0:T(1,128)}', space=vmem, size = 0x12000, scoped, tag = 'internal scratch']
  %s0 = inlined_call_operand.hbm [shape: f32[16,32], index: 0, kind: input, shape index: {}]
  %s1 = inlined_call_operand.hbm [shape: f32[32,96], index: 1, kind: input, shape index: {}]
  %s2 = inlined_call_operand.vmem [shape: f32[1,96], index: 2, kind: input, shape index: {}]
  %s3 = inlined_call_operand.hbm [shape: f32[16,48], index: 3, kind: input, shape index: {}]
  %s4 = inlined_call_operand.hbm [shape: f32[16,48], index: 4, kind: input, shape index: {}]
  %s5 = inlined_call_operand.vmem [shape: f32[1,16], index: 5, kind: input, shape index: {}]
  %s6 = inlined_call_operand.vmem [shape: f32[1,16], index: 6, kind: input, shape index: {}]
  %s7 = inlined_call_operand.hbm [shape: f32[32,128], index: 7, kind: input, shape index: {}]
  %s8 = inlined_call_operand.vmem [shape: f32[1,128], index: 8, kind: input, shape index: {}]
  %s9 = inlined_call_operand.vmem [shape: s32[2,1], index: 9, kind: input, shape index: {}]
  %s10 = inlined_call_operand.hbm [shape: f32[2,128], index: 10, kind: output, shape index: {0}]
  %s11 = inlined_call_operand.hbm [shape: f32[1,1], index: 11, kind: output, shape index: {1}]
  %12 = xla_tuple %s10, %s11
  %s13 = sld [smem:[#allocation0]]
  $region78: #{tpu_custom_call.1} parent=0
    _
  %s15 = ssub.s32 1, %s13
  %s16 = scalar_select 0, %s15, %s13
  $region1: #{tpu_custom_call.1} parent=0
    #allocation2 [shape = 'u8[8192]{0}', space=vmem, size = 0x2000, scoped, tag = 'input window, operand 0, single buffered']
    #allocation3 [shape = 's32[1]{0}', space=sflag, size = 0x4, scoped, tag = 'scoped memory for tpu_custom_call.1']
    #allocation4 [shape = 's32[1]{0}', space=sflag, size = 0x4, scoped, tag = 'scoped memory for tpu_custom_call.1']
    #allocation5 [shape = 's32[1]{0}', space=sflag, size = 0x4, scoped, tag = 'scoped memory for tpu_custom_call.1']
    #allocation6 [shape = 'u8[16384]{0}', space=vmem, size = 0x4000, scoped, tag = 'input window, operand 1, single buffered']
    #allocation7 [shape = 's32[1]{0}', space=sflag, size = 0x4, scoped, tag = 'scoped memory for tpu_custom_call.1']
    #allocation8 [shape = 'u8[8192]{0}', space=vmem, size = 0x2000, scoped, tag = 'input window, operand 3, single buffered']
    #allocation9 [shape = 'u8[8192]{0}', space=vmem, size = 0x2000, scoped, tag = 'input window, operand 4, single buffered']
    #allocation10 [shape = 's32[1]{0}', space=sflag, size = 0x4, scoped, tag = 'scoped memory for tpu_custom_call.1']
    #allocation11 [shape = 'u8[16384]{0}', space=vmem, size = 0x4000, scoped, tag = 'input window, operand 7, single buffered']
    #allocation12 [shape = 'u8[1024]{0}', space=vmem, size = 0x400, scoped, tag = 'output window, operand 0, single buffered']
    #allocation13 [shape = 'u8[512]{0}', space=smem, size = 0x200, scoped, tag = 'output window, operand 1, single buffered']
    %17 = vsyncpa [#allocation3], 0
    %18 = vsyncpa [#allocation7], 0
    %19 = vsyncpa [#allocation10], 0
    %20 = vsyncpa [#allocation4], 0
    %21 = vsyncpa [#allocation5], 0
    // Predicated region
    $region2: #{tpu_custom_call.1} parent=1 // pred_check
      _
    $region3: #{tpu_custom_call.1} parent=1 // pred_check_branch
      %23 = sbr.rel (0) target = $region5
    $region4: #{tpu_custom_call.1} parent=1 // pred_region
      %s25 = ssub.s32 256, 256
      %26 = vsyncadd [#allocation3], %s25
      %s27 = sshll.u32 [#allocation2], 4
      %s28 = int_to_ptr.vmem [resolvable:$true] %s27
      %33 = dma.hbm_to_vmem [thread:$0]  %s0, 256, %s28, [#allocation3], 128, 128, 8
    $region5: #{tpu_custom_call.1} parent=1 // pred_fallthru
      _
    // Predicated region
    $region6: #{tpu_custom_call.1} parent=1 // pred_check
      _
    $region7: #{tpu_custom_call.1} parent=1 // pred_check_branch
      %35 = sbr.rel (0) target = $region9
    $region8: #{tpu_custom_call.1} parent=1 // pred_region
      %s37 = ssub.s32 512, 512
      %38 = vsyncadd [#allocation7], %s37
      %s39 = sshll.u32 [#allocation6], 4
      %s40 = int_to_ptr.vmem [resolvable:$true] %s39
      %45 = dma.hbm_to_vmem [thread:$0]  %s1, 512, %s40, [#allocation7], 128, 128, 8
    $region9: #{tpu_custom_call.1} parent=1 // pred_fallthru
      _
    // Predicated region
    $region10: #{tpu_custom_call.1} parent=1 // pred_check
      _
    $region11: #{tpu_custom_call.1} parent=1 // pred_check_branch
      %47 = sbr.rel (0) target = $region13
    $region12: #{tpu_custom_call.1} parent=1 // pred_region
      _
    $region13: #{tpu_custom_call.1} parent=1 // pred_fallthru
      _
    // Predicated region
    $region14: #{tpu_custom_call.1} parent=1 // pred_check
      _
    $region15: #{tpu_custom_call.1} parent=1 // pred_check_branch
      %49 = sbr.rel (0) target = $region17
    $region16: #{tpu_custom_call.1} parent=1 // pred_region
      %s51 = ssub.s32 256, 256
      %52 = vsyncadd [#allocation7], %s51
      %s53 = sshll.u32 [#allocation8], 4
      %s54 = int_to_ptr.vmem [resolvable:$true] %s53
      %59 = dma.hbm_to_vmem [thread:$0]  %s3, 256, %s54, [#allocation7], 128, 128, 8
    $region17: #{tpu_custom_call.1} parent=1 // pred_fallthru
      _
    // Predicated region
    $region18: #{tpu_custom_call.1} parent=1 // pred_check
      _
    $region19: #{tpu_custom_call.1} parent=1 // pred_check_branch
      %61 = sbr.rel (0) target = $region21
    $region20: #{tpu_custom_call.1} parent=1 // pred_region
      %s63 = ssub.s32 256, 256
      %64 = vsyncadd [#allocation10], %s63
      %s65 = sshll.u32 [#allocation9], 4
      %s66 = int_to_ptr.vmem [resolvable:$true] %s65
      %71 = dma.hbm_to_vmem [thread:$0]  %s4, 256, %s66, [#allocation10], 128, 128, 8
    $region21: #{tpu_custom_call.1} parent=1 // pred_fallthru
      _
    // Predicated region
    $region22: #{tpu_custom_call.1} parent=1 // pred_check
      _
    $region23: #{tpu_custom_call.1} parent=1 // pred_check_branch
      %73 = sbr.rel (0) target = $region25
    $region24: #{tpu_custom_call.1} parent=1 // pred_region
      _
    $region25: #{tpu_custom_call.1} parent=1 // pred_fallthru
      _
    // Predicated region
    $region26: #{tpu_custom_call.1} parent=1 // pred_check
      _
    $region27: #{tpu_custom_call.1} parent=1 // pred_check_branch
      %75 = sbr.rel (0) target = $region29
    $region28: #{tpu_custom_call.1} parent=1 // pred_region
      _
    $region29: #{tpu_custom_call.1} parent=1 // pred_fallthru
      _
    // Predicated region
    $region30: #{tpu_custom_call.1} parent=1 // pred_check
      _
    $region31: #{tpu_custom_call.1} parent=1 // pred_check_branch
      %77 = sbr.rel (0) target = $region33
    $region32: #{tpu_custom_call.1} parent=1 // pred_region
      %s79 = ssub.s32 512, 512
      %80 = vsyncadd [#allocation10], %s79
      %s81 = sshll.u32 [#allocation11], 4
      %s82 = int_to_ptr.vmem [resolvable:$true] %s81
      %87 = dma.hbm_to_vmem [thread:$0]  %s7, 512, %s82, [#allocation10], 128, 128, 8
    $region33: #{tpu_custom_call.1} parent=1 // pred_fallthru
      _
    // Predicated region
    $region34: #{tpu_custom_call.1} parent=1 // pred_check
      _
    $region35: #{tpu_custom_call.1} parent=1 // pred_check_branch
      %89 = sbr.rel (0) target = $region37
    $region36: #{tpu_custom_call.1} parent=1 // pred_region
      _
    $region37: #{tpu_custom_call.1} parent=1 // pred_fallthru
      _
    // Predicated region
    $region38: #{tpu_custom_call.1} parent=1 // pred_check
      _
    $region39: #{tpu_custom_call.1} parent=1 // pred_check_branch
      %91 = sbr.rel (0) target = $region41
    $region40: #{tpu_custom_call.1} parent=1 // pred_region
      _
    $region41: #{tpu_custom_call.1} parent=1 // pred_fallthru
      _
    // Predicated region
    $region42: #{tpu_custom_call.1} parent=1 // pred_check
      _
    $region43: #{tpu_custom_call.1} parent=1 // pred_check_branch
      %93 = sbr.rel (0) target = $region45
    $region44: #{tpu_custom_call.1} parent=1 // pred_region
      %94 = dma.done [#allocation3], 256
    $region45: #{tpu_custom_call.1} parent=1 // pred_fallthru
      _
    // Predicated region
    $region46: #{tpu_custom_call.1} parent=1 // pred_check
      _
    $region47: #{tpu_custom_call.1} parent=1 // pred_check_branch
      %96 = sbr.rel (0) target = $region49
    $region48: #{tpu_custom_call.1} parent=1 // pred_region
      %97 = dma.done [#allocation7], 512
    $region49: #{tpu_custom_call.1} parent=1 // pred_fallthru
      _
    // Predicated region
    $region50: #{tpu_custom_call.1} parent=1 // pred_check
      _
    $region51: #{tpu_custom_call.1} parent=1 // pred_check_branch
      %99 = sbr.rel (0) target = $region53
    $region52: #{tpu_custom_call.1} parent=1 // pred_region
      %100 = dma.done [#allocation7], 256
    $region53: #{tpu_custom_call.1} parent=1 // pred_fallthru
      _
    // Predicated region
    $region54: #{tpu_custom_call.1} parent=1 // pred_check
      _
    $region55: #{tpu_custom_call.1} parent=1 // pred_check_branch
      %102 = sbr.rel (0) target = $region57
    $region56: #{tpu_custom_call.1} parent=1 // pred_region
      %103 = dma.done [#allocation10], 256
    $region57: #{tpu_custom_call.1} parent=1 // pred_fallthru
      _
    // Predicated region
    $region58: #{tpu_custom_call.1} parent=1 // pred_check
      _
    $region59: #{tpu_custom_call.1} parent=1 // pred_check_branch
      %105 = sbr.rel (0) target = $region61
    $region60: #{tpu_custom_call.1} parent=1 // pred_region
      %106 = dma.done [#allocation10], 512
    $region61: #{tpu_custom_call.1} parent=1 // pred_fallthru
      _
    %v107 = vld [vmem:[#allocation2] sm:$0xff]
    %v108 = vld [vmem:[#allocation2 + $0x8] sm:$0xff]
    %v109 = vld [vmem:[#allocation6] sm:$0xff]
    %v110 = vld [vmem:[#allocation6 + $0x8] sm:$0xff]
    %v111 = vld [vmem:[#allocation6 + $0x10] sm:$0xff]
    %v112 = vld [vmem:[#allocation6 + $0x18] sm:$0xff]
    %v113 = vld [vmem:[%s2] sm:$0x1]
    %v115 = vlaneseq
    %v116 = vshrl.u32 %v115, 7
    %v117 = vsub.s32 0, %v116
    %v118 = vrot.slane %v113, %v117
    %vm120 = vcmask 261120
    %v122 = vsel %vm120, %v107, 0
    %v125 = vsel %vm120, %v108, 0
    %127 = vmatprep.subr.mxu0 0.0
    %128 = vmatpush1.msra.mxu0 0.0
    %129 = vmatprep.subr.mxu0 0.0
    %130 = vmatpush1.msra.mxu0 0.0
    %131 = vmatprep.subr.mxu0 0.0
    %132 = vmatpush1.msra.mxu0 0.0
    %133 = vmatprep.subr.mxu0 0.0
    %134 = vmatpush1.msra.mxu0 0.0
    %135 = vmatprep.subr.mxu0 0.0
    %136 = vmatpush1.msra.mxu0 0.0
    %137 = vmatprep.subr.mxu0 0.0
    %138 = vmatpush1.msra.mxu0 0.0
    %139 = vmatprep.subr.mxu0 0.0
    %140 = vmatpush1.msra.mxu0 0.0
    %141 = vmatprep.subr.mxu0 0.0
    %142 = vmatpush1.msra.mxu0 0.0
    %143 = vmatprep.subr.mxu0 0.0
    %144 = vmatpush1.msra.mxu0 0.0
    %145 = vmatprep.subr.mxu0 0.0
    %146 = vmatpush1.msra.mxu0 0.0
    %147 = vmatprep.subr.mxu0 0.0
    %148 = vmatpush1.msra.mxu0 0.0
    %149 = vmatprep.subr.mxu0 0.0
    %150 = vmatpush1.msra.mxu0 0.0
    %151 = vmatprep.subr.mxu0 0.0
    %152 = vmatpush1.msra.mxu0 %v112
    %153 = vmatprep.subr.mxu0 0.0
    %154 = vmatpush1.msra.mxu0 %v111
    %155 = vmatprep.subr.mxu0 0.0
    %156 = vmatpush1.msra.mxu0 %v110
    %157 = vmatprep.subr.mxu0 0.0
    %158 = vmatpush1.msra.mxu0 %v109
    %159 = vmatprep.subr.mxu0 0.0
    %160 = vmatpush2.msra.mxu0 0.0
    %161 = vmatprep.subr.mxu0 0.0
    %162 = vmatpush2.msra.mxu0 0.0
    %163 = vmatprep.subr.mxu0 0.0
    %164 = vmatpush2.msra.mxu0 0.0
    %165 = vmatprep.subr.mxu0 0.0
    %166 = vmatpush2.msra.mxu0 0.0
    %167 = vmatprep.subr.mxu0 0.0
    %168 = vmatpush2.msra.mxu0 0.0
    %169 = vmatprep.subr.mxu0 0.0
    %170 = vmatpush2.msra.mxu0 0.0
    %171 = vmatprep.subr.mxu0 0.0
    %172 = vmatpush2.msra.mxu0 0.0
    %173 = vmatprep.subr.mxu0 0.0
    %174 = vmatpush2.msra.mxu0 0.0
    %175 = vmatprep.subr.mxu0 0.0
    %176 = vmatpush2.msra.mxu0 0.0
    %177 = vmatprep.subr.mxu0 0.0
    %178 = vmatpush2.msra.mxu0 0.0
    %179 = vmatprep.subr.mxu0 0.0
    %180 = vmatpush2.msra.mxu0 0.0
    %181 = vmatprep.subr.mxu0 0.0
    %182 = vmatpush2.msra.mxu0 0.0
    %183 = vmatprep.subr.mxu0 0.0
    %184 = vmatpush2.msra.mxu0 0.0
    %185 = vmatprep.subr.mxu0 0.0
    %186 = vmatpush2.msra.mxu0 0.0
    %187 = vmatprep.subr.mxu0 0.0
    %188 = vmatpush2.msra.mxu0 0.0
    %189 = vmatprep.subr.mxu0 0.0
    %190 = vmatpush2.msra.mxu0 0.0
    %191 = vmatprep.mubr.f32.mxu0 0.0
    %192 = vmatmul.mubr.f32.gmra.mxu0 %v122
    %v193 = vpop.f32.mrf.mxu0
    %v194 = vadd.f32 %v118, %v193
    %v195 = vpop.f32.mrf.mxu0
    %196 = vmatprep.mubr.f32.mxu0 0.0
    %197 = vmatmul.mubr.f32.gmra.mxu0 %v125
    %v198 = vpop.f32.mrf.mxu0
    %v199 = vadd.f32 %v118, %v198
    %v200 = vpop.f32.mrf.mxu0
    %201 = vdwg.mxu0
    %v202 = vld [vmem:[#allocation8] sm:$0xff]
    %v203 = vld [vmem:[#allocation8 + $0x8] sm:$0xff]
    %v204 = vld [vmem:[#allocation9] sm:$0xff]
    %v205 = vld [vmem:[#allocation9 + $0x8] sm:$0xff]
    %v206 = vld [vmem:[%s5] sm:$0x1]
    %v208 = vlaneseq
    %v209 = vshrl.u32 %v208, 7
    %v210 = vsub.s32 0, %v209
    %v211 = vrot.slane %v206, %v210
    %v212 = vld [vmem:[%s6] sm:$0x1]
    %v214 = vlaneseq
    %v215 = vshrl.u32 %v214, 7
    %v216 = vsub.s32 0, %v215
    %v217 = vrot.slane %v212, %v216
    %vm218 = vcmask 130048
    %v220 = vsel %vm218, 0.0, 0
    %222 = vmatprep.subr.mxu0 0.0
    %223 = vmatpush1.msra.mxu0 0.0
    %224 = vmatprep.subr.mxu0 0.0
    %225 = vmatpush1.msra.mxu0 0.0
    %226 = vmatprep.subr.mxu0 0.0
    %227 = vmatpush1.msra.mxu0 0.0
    %228 = vmatprep.subr.mxu0 0.0
    %229 = vmatpush1.msra.mxu0 0.0
    %230 = vmatprep.subr.mxu0 0.0
    %231 = vmatpush1.msra.mxu0 0.0
    %232 = vmatprep.subr.mxu0 0.0
    %233 = vmatpush1.msra.mxu0 0.0
    %234 = vmatprep.subr.mxu0 0.0
    %235 = vmatpush1.msra.mxu0 0.0
    %236 = vmatprep.subr.mxu0 0.0
    %237 = vmatpush1.msra.mxu0 0.0
    %238 = vmatprep.subr.mxu0 0.0
    %239 = vmatpush1.msra.mxu0 0.0
    %240 = vmatprep.subr.mxu0 0.0
    %241 = vmatpush1.msra.mxu0 0.0
    %242 = vmatprep.subr.mxu0 0.0
    %243 = vmatpush1.msra.mxu0 0.0
    %244 = vmatprep.subr.mxu0 0.0
    %245 = vmatpush1.msra.mxu0 0.0
    %246 = vmatprep.subr.mxu0 0.0
    %247 = vmatpush1.msra.mxu0 0.0
    %248 = vmatprep.subr.mxu0 0.0
    %249 = vmatpush1.msra.mxu0 0.0
    %250 = vmatprep.subr.mxu0 0.0
    %251 = vmatpush1.msra.mxu0 %v203
    %252 = vmatprep.subr.mxu0 0.0
    %253 = vmatpush1.msra.mxu0 %v202
    %254 = vmatprep.subr.mxu0 0.0
    %255 = vmatpush2.msra.mxu0 0.0
    %256 = vmatprep.subr.mxu0 0.0
    %257 = vmatpush2.msra.mxu0 0.0
    %258 = vmatprep.subr.mxu0 0.0
    %259 = vmatpush2.msra.mxu0 0.0
    %260 = vmatprep.subr.mxu0 0.0
    %261 = vmatpush2.msra.mxu0 0.0
    %262 = vmatprep.subr.mxu0 0.0
    %263 = vmatpush2.msra.mxu0 0.0
    %264 = vmatprep.subr.mxu0 0.0
    %265 = vmatpush2.msra.mxu0 0.0
    %266 = vmatprep.subr.mxu0 0.0
    %267 = vmatpush2.msra.mxu0 0.0
    %268 = vmatprep.subr.mxu0 0.0
    %269 = vmatpush2.msra.mxu0 0.0
    %270 = vmatprep.subr.mxu0 0.0
    %271 = vmatpush2.msra.mxu0 0.0
    %272 = vmatprep.subr.mxu0 0.0
    %273 = vmatpush2.msra.mxu0 0.0
    %274 = vmatprep.subr.mxu0 0.0
    %275 = vmatpush2.msra.mxu0 0.0
    %276 = vmatprep.subr.mxu0 0.0
    %277 = vmatpush2.msra.mxu0 0.0
    %278 = vmatprep.subr.mxu0 0.0
    %279 = vmatpush2.msra.mxu0 0.0
    %280 = vmatprep.subr.mxu0 0.0
    %281 = vmatpush2.msra.mxu0 0.0
    %282 = vmatprep.subr.mxu0 0.0
    %283 = vmatpush2.msra.mxu0 0.0
    %284 = vmatprep.subr.mxu0 0.0
    %285 = vmatpush2.msra.mxu0 0.0
    %286 = vmatprep.mubr.f32.mxu0 0.0
    %287 = vmatmul.mubr.f32.gmra.mxu0 %v220
    %v288 = vpop.f32.mrf.mxu0
    %v289 = vadd.f32 0.0, %v288
    %v290 = vpop.f32.mrf.mxu0
    %291 = vdwg.mxu0
    %292 = vmatprep.subr.mxu0 0.0
    %293 = vmatpush1.msra.mxu0 0.0
    %294 = vmatprep.subr.mxu0 0.0
    %295 = vmatpush1.msra.mxu0 0.0
    %296 = vmatprep.subr.mxu0 0.0
    %297 = vmatpush1.msra.mxu0 0.0
    %298 = vmatprep.subr.mxu0 0.0
    %299 = vmatpush1.msra.mxu0 0.0
    %300 = vmatprep.subr.mxu0 0.0
    %301 = vmatpush1.msra.mxu0 0.0
    %302 = vmatprep.subr.mxu0 0.0
    %303 = vmatpush1.msra.mxu0 0.0
    %304 = vmatprep.subr.mxu0 0.0
    %305 = vmatpush1.msra.mxu0 0.0
    %306 = vmatprep.subr.mxu0 0.0
    %307 = vmatpush1.msra.mxu0 0.0
    %308 = vmatprep.subr.mxu0 0.0
    %309 = vmatpush1.msra.mxu0 0.0
    %310 = vmatprep.subr.mxu0 0.0
    %311 = vmatpush1.msra.mxu0 0.0
    %312 = vmatprep.subr.mxu0 0.0
    %313 = vmatpush1.msra.mxu0 0.0
    %314 = vmatprep.subr.mxu0 0.0
    %315 = vmatpush1.msra.mxu0 0.0
    %316 = vmatprep.subr.mxu0 0.0
    %317 = vmatpush1.msra.mxu0 0.0
    %318 = vmatprep.subr.mxu0 0.0
    %319 = vmatpush1.msra.mxu0 0.0
    %320 = vmatprep.subr.mxu0 0.0
    %321 = vmatpush1.msra.mxu0 %v205
    %322 = vmatprep.subr.mxu0 0.0
    %323 = vmatpush1.msra.mxu0 %v204
    %324 = vmatprep.subr.mxu0 0.0
    %325 = vmatpush2.msra.mxu0 0.0
    %326 = vmatprep.subr.mxu0 0.0
    %327 = vmatpush2.msra.mxu0 0.0
    %328 = vmatprep.subr.mxu0 0.0
    %329 = vmatpush2.msra.mxu0 0.0
    %330 = vmatprep.subr.mxu0 0.0
    %331 = vmatpush2.msra.mxu0 0.0
    %332 = vmatprep.subr.mxu0 0.0
    %333 = vmatpush2.msra.mxu0 0.0
    %334 = vmatprep.subr.mxu0 0.0
    %335 = vmatpush2.msra.mxu0 0.0
    %336 = vmatprep.subr.mxu0 0.0
    %337 = vmatpush2.msra.mxu0 0.0
    %338 = vmatprep.subr.mxu0 0.0
    %339 = vmatpush2.msra.mxu0 0.0
    %340 = vmatprep.subr.mxu0 0.0
    %341 = vmatpush2.msra.mxu0 0.0
    %342 = vmatprep.subr.mxu0 0.0
    %343 = vmatpush2.msra.mxu0 0.0
    %344 = vmatprep.subr.mxu0 0.0
    %345 = vmatpush2.msra.mxu0 0.0
    %346 = vmatprep.subr.mxu0 0.0
    %347 = vmatpush2.msra.mxu0 0.0
    %348 = vmatprep.subr.mxu0 0.0
    %349 = vmatpush2.msra.mxu0 0.0
    %350 = vmatprep.subr.mxu0 0.0
    %351 = vmatpush2.msra.mxu0 0.0
    %352 = vmatprep.subr.mxu0 0.0
    %353 = vmatpush2.msra.mxu0 0.0
    %354 = vmatprep.subr.mxu0 0.0
    %355 = vmatpush2.msra.mxu0 0.0
    %356 = vmatprep.mubr.f32.mxu0 0.0
    %357 = vmatmul.mubr.f32.gmra.mxu0 %v220
    %v358 = vpop.f32.mrf.mxu0
    %v359 = vadd.f32 0.0, %v358
    %v360 = vpop.f32.mrf.mxu0
    %361 = vdwg.mxu0
    %v362 = vadd.f32 %v194, %v289
    %v363 = vxor.u32 %v362, 2147483648
    %v364 = vmul.f32 %v363, 1.442695
    %v365 = vpow.pop %v364
    %v366 = vadd.f32 %v365, 1.0
    %v367 = vrcp.pop %v366
    %v368 = vmul.f32 1.0, %v367
    %v370 = vrot.slane %v359, 2
    %371 = vrot.lane.b32.xlu0 %v370, 48
    %v372 = vpop.permute.xlu0 %371
    %v374 = vadd.f32 %v199, %v372
    %v375 = vxor.u32 %v374, 2147483648
    %v376 = vmul.f32 %v375, 1.442695
    %v377 = vpow.pop %v376
    %v378 = vadd.f32 %v377, 1.0
    %v379 = vrcp.pop %v378
    %v380 = vmul.f32 1.0, %v379
    %381 = vrot.lane.b32.xlu0 %v211, 32
    %v382 = vpop.permute.xlu0 %381
    %v384 = vadd.f32 %v289, %v382
    %386 = vrot.lane.b32.xlu0 %v384, 96
    %v387 = vpop.permute.xlu0 %386
    %v389 = vmul.f32 %v368, %v387
    %391 = vrot.lane.b32.xlu0 %v389, 32
    %v392 = vpop.permute.xlu0 %391
    %v394 = vadd.f32 %v194, %v392
    %v395 = vtanh.pop %v394
    %396 = vrot.lane.b32.xlu0 %v217, 32
    %v397 = vpop.permute.xlu0 %396
    %v399 = vadd.f32 %v359, %v397
    %v401 = vrot.slane %v399, 2
    %402 = vrot.lane.b32.xlu0 %v401, 16
    %v403 = vpop.permute.xlu0 %402
    %v405 = vmul.f32 %v380, %v403
    %407 = vrot.lane.b32.xlu0 %v405, 32
    %v408 = vpop.permute.xlu0 %407
    %v410 = vadd.f32 %v199, %v408
    %v411 = vtanh.pop %v410
    %v412 = vsub.f32 1.0, %v368
    %414 = vrot.lane.b32.xlu0 %v395, 112
    %v415 = vpop.permute.xlu0 %414
    %v417 = vmul.f32 %v412, %v415
    %v418 = vmul.f32 %v368, 0.0
    %v419 = vadd.f32 %v417, %v418
    %v420 = vsub.f32 1.0, %v380
    %422 = vrot.lane.b32.xlu0 %v411, 112
    %v423 = vpop.permute.xlu0 %422
    %v425 = vmul.f32 %v420, %v423
    %v426 = vmul.f32 %v380, 0.0
    %v427 = vadd.f32 %v425, %v426
    %429 = vrot.lane.b32.xlu0 %v419, 112
    %v430 = vpop.permute.xlu0 %429
    %v431 = vsel %vm218, %v430, 0
    %433 = vmatprep.subr.mxu0 0.0
    %434 = vmatpush1.msra.mxu0 0.0
    %435 = vmatprep.subr.mxu0 0.0
    %436 = vmatpush1.msra.mxu0 0.0
    %437 = vmatprep.subr.mxu0 0.0
    %438 = vmatpush1.msra.mxu0 0.0
    %439 = vmatprep.subr.mxu0 0.0
    %440 = vmatpush1.msra.mxu0 0.0
    %441 = vmatprep.subr.mxu0 0.0
    %442 = vmatpush1.msra.mxu0 0.0
    %443 = vmatprep.subr.mxu0 0.0
    %444 = vmatpush1.msra.mxu0 0.0
    %445 = vmatprep.subr.mxu0 0.0
    %446 = vmatpush1.msra.mxu0 0.0
    %447 = vmatprep.subr.mxu0 0.0
    %448 = vmatpush1.msra.mxu0 0.0
    %449 = vmatprep.subr.mxu0 0.0
    %450 = vmatpush1.msra.mxu0 0.0
    %451 = vmatprep.subr.mxu0 0.0
    %452 = vmatpush1.msra.mxu0 0.0
    %453 = vmatprep.subr.mxu0 0.0
    %454 = vmatpush1.msra.mxu0 0.0
    %455 = vmatprep.subr.mxu0 0.0
    %456 = vmatpush1.msra.mxu0 0.0
    %457 = vmatprep.subr.mxu0 0.0
    %458 = vmatpush1.msra.mxu0 0.0
    %459 = vmatprep.subr.mxu0 0.0
    %460 = vmatpush1.msra.mxu0 0.0
    %461 = vmatprep.subr.mxu0 0.0
    %462 = vmatpush1.msra.mxu0 %v203
    %463 = vmatprep.subr.mxu0 0.0
    %464 = vmatpush1.msra.mxu0 %v202
    %465 = vmatprep.subr.mxu0 0.0
    %466 = vmatpush2.msra.mxu0 0.0
    %467 = vmatprep.subr.mxu0 0.0
    %468 = vmatpush2.msra.mxu0 0.0
    %469 = vmatprep.subr.mxu0 0.0
    %470 = vmatpush2.msra.mxu0 0.0
    %471 = vmatprep.subr.mxu0 0.0
    %472 = vmatpush2.msra.mxu0 0.0
    %473 = vmatprep.subr.mxu0 0.0
    %474 = vmatpush2.msra.mxu0 0.0
    %475 = vmatprep.subr.mxu0 0.0
    %476 = vmatpush2.msra.mxu0 0.0
    %477 = vmatprep.subr.mxu0 0.0
    %478 = vmatpush2.msra.mxu0 0.0
    %479 = vmatprep.subr.mxu0 0.0
    %480 = vmatpush2.msra.mxu0 0.0
    %481 = vmatprep.subr.mxu0 0.0
    %482 = vmatpush2.msra.mxu0 0.0
    %483 = vmatprep.subr.mxu0 0.0
    %484 = vmatpush2.msra.mxu0 0.0
    %485 = vmatprep.subr.mxu0 0.0
    %486 = vmatpush2.msra.mxu0 0.0
    %487 = vmatprep.subr.mxu0 0.0
    %488 = vmatpush2.msra.mxu0 0.0
    %489 = vmatprep.subr.mxu0 0.0
    %490 = vmatpush2.msra.mxu0 0.0
    %491 = vmatprep.subr.mxu0 0.0
    %492 = vmatpush2.msra.mxu0 0.0
    %493 = vmatprep.subr.mxu0 0.0
    %494 = vmatpush2.msra.mxu0 0.0
    %495 = vmatprep.subr.mxu0 0.0
    %496 = vmatpush2.msra.mxu0 0.0
    %497 = vmatprep.mubr.f32.mxu0 0.0
    %498 = vmatmul.mubr.f32.gmra.mxu0 %v431
    %v499 = vpop.f32.mrf.mxu0
    %v500 = vadd.f32 0.0, %v499
    %v501 = vpop.f32.mrf.mxu0
    %502 = vdwg.mxu0
    %v504 = vrot.slane %v427, 6
    %505 = vrot.lane.b32.xlu0 %v504, 64
    %v506 = vpop.permute.xlu0 %505
    %v507 = vsel %vm218, %v506, 0
    %509 = vmatprep.subr.mxu0 0.0
    %510 = vmatpush1.msra.mxu0 0.0
    %511 = vmatprep.subr.mxu0 0.0
    %512 = vmatpush1.msra.mxu0 0.0
    %513 = vmatprep.subr.mxu0 0.0
    %514 = vmatpush1.msra.mxu0 0.0
    %515 = vmatprep.subr.mxu0 0.0
    %516 = vmatpush1.msra.mxu0 0.0
    %517 = vmatprep.subr.mxu0 0.0
    %518 = vmatpush1.msra.mxu0 0.0
    %519 = vmatprep.subr.mxu0 0.0
    %520 = vmatpush1.msra.mxu0 0.0
    %521 = vmatprep.subr.mxu0 0.0
    %522 = vmatpush1.msra.mxu0 0.0
    %523 = vmatprep.subr.mxu0 0.0
    %524 = vmatpush1.msra.mxu0 0.0
    %525 = vmatprep.subr.mxu0 0.0
    %526 = vmatpush1.msra.mxu0 0.0
    %527 = vmatprep.subr.mxu0 0.0
    %528 = vmatpush1.msra.mxu0 0.0
    %529 = vmatprep.subr.mxu0 0.0
    %530 = vmatpush1.msra.mxu0 0.0
    %531 = vmatprep.subr.mxu0 0.0
    %532 = vmatpush1.msra.mxu0 0.0
    %533 = vmatprep.subr.mxu0 0.0
    %534 = vmatpush1.msra.mxu0 0.0
    %535 = vmatprep.subr.mxu0 0.0
    %536 = vmatpush1.msra.mxu0 0.0
    %537 = vmatprep.subr.mxu0 0.0
    %538 = vmatpush1.msra.mxu0 %v205
    %539 = vmatprep.subr.mxu0 0.0
    %540 = vmatpush1.msra.mxu0 %v204
    %541 = vmatprep.subr.mxu0 0.0
    %542 = vmatpush2.msra.mxu0 0.0
    %543 = vmatprep.subr.mxu0 0.0
    %544 = vmatpush2.msra.mxu0 0.0
    %545 = vmatprep.subr.mxu0 0.0
    %546 = vmatpush2.msra.mxu0 0.0
    %547 = vmatprep.subr.mxu0 0.0
    %548 = vmatpush2.msra.mxu0 0.0
    %549 = vmatprep.subr.mxu0 0.0
    %550 = vmatpush2.msra.mxu0 0.0
    %551 = vmatprep.subr.mxu0 0.0
    %552 = vmatpush2.msra.mxu0 0.0
    %553 = vmatprep.subr.mxu0 0.0
    %554 = vmatpush2.msra.mxu0 0.0
    %555 = vmatprep.subr.mxu0 0.0
    %556 = vmatpush2.msra.mxu0 0.0
    %557 = vmatprep.subr.mxu0 0.0
    %558 = vmatpush2.msra.mxu0 0.0
    %559 = vmatprep.subr.mxu0 0.0
    %560 = vmatpush2.msra.mxu0 0.0
    %561 = vmatprep.subr.mxu0 0.0
    %562 = vmatpush2.msra.mxu0 0.0
    %563 = vmatprep.subr.mxu0 0.0
    %564 = vmatpush2.msra.mxu0 0.0
    %565 = vmatprep.subr.mxu0 0.0
    %566 = vmatpush2.msra.mxu0 0.0
    %567 = vmatprep.subr.mxu0 0.0
    %568 = vmatpush2.msra.mxu0 0.0
    %569 = vmatprep.subr.mxu0 0.0
    %570 = vmatpush2.msra.mxu0 0.0
    %571 = vmatprep.subr.mxu0 0.0
    %572 = vmatpush2.msra.mxu0 0.0
    %573 = vmatprep.mubr.f32.mxu0 0.0
    %574 = vmatmul.mubr.f32.gmra.mxu0 %v507
    %v575 = vpop.f32.mrf.mxu0
    %v576 = vadd.f32 0.0, %v575
    %v577 = vpop.f32.mrf.mxu0
    %578 = vdwg.mxu0
    %v580 = vrot.slane %v500, 6
    %v582 = vadd.f32 %v194, %v580
    %v583 = vxor.u32 %v582, 2147483648
    %v584 = vmul.f32 %v583, 1.442695
    %v585 = vpow.pop %v584
    %v586 = vadd.f32 %v585, 1.0
    %v587 = vrcp.pop %v586
    %v588 = vmul.f32 1.0, %v587
    %v590 = vrot.slane %v576, 4
    %591 = vrot.lane.b32.xlu0 %v590, 48
    %v592 = vpop.permute.xlu0 %591
    %v594 = vadd.f32 %v199, %v592
    %v595 = vxor.u32 %v594, 2147483648
    %v596 = vmul.f32 %v595, 1.442695
    %v597 = vpow.pop %v596
    %v598 = vadd.f32 %v597, 1.0
    %v599 = vrcp.pop %v598
    %v600 = vmul.f32 1.0, %v599
    %v601 = vadd.f32 %v500, %v382
    %v603 = vrot.slane %v601, 6
    %604 = vrot.lane.b32.xlu0 %v603, 96
    %v605 = vpop.permute.xlu0 %604
    %v607 = vmul.f32 %v588, %v605
    %609 = vrot.lane.b32.xlu0 %v607, 32
    %v610 = vpop.permute.xlu0 %609
    %v612 = vadd.f32 %v194, %v610
    %v613 = vtanh.pop %v612
    %v614 = vadd.f32 %v576, %v397
    %v616 = vrot.slane %v614, 4
    %617 = vrot.lane.b32.xlu0 %v616, 16
    %v618 = vpop.permute.xlu0 %617
    %v620 = vmul.f32 %v600, %v618
    %622 = vrot.lane.b32.xlu0 %v620, 32
    %v623 = vpop.permute.xlu0 %622
    %v625 = vadd.f32 %v199, %v623
    %v626 = vtanh.pop %v625
    %v627 = vsub.f32 1.0, %v588
    %629 = vrot.lane.b32.xlu0 %v613, 112
    %v630 = vpop.permute.xlu0 %629
    %v632 = vmul.f32 %v627, %v630
    %v633 = vrot.slane %v419, 6
    %v635 = vmul.f32 %v588, %v633
    %v636 = vadd.f32 %v632, %v635
    %v637 = vsub.f32 1.0, %v600
    %639 = vrot.lane.b32.xlu0 %v626, 112
    %v640 = vpop.permute.xlu0 %639
    %v642 = vmul.f32 %v637, %v640
    %v643 = vrot.slane %v427, 2
    %v645 = vmul.f32 %v600, %v643
    %v646 = vadd.f32 %v642, %v645
    %v648 = vrot.slane %v636, 2
    %649 = vrot.lane.b32.xlu0 %v648, 112
    %v650 = vpop.permute.xlu0 %649
    %v651 = vsel %vm218, %v650, 0
    %653 = vmatprep.subr.mxu0 0.0
    %654 = vmatpush1.msra.mxu0 0.0
    %655 = vmatprep.subr.mxu0 0.0
    %656 = vmatpush1.msra.mxu0 0.0
    %657 = vmatprep.subr.mxu0 0.0
    %658 = vmatpush1.msra.mxu0 0.0
    %659 = vmatprep.subr.mxu0 0.0
    %660 = vmatpush1.msra.mxu0 0.0
    %661 = vmatprep.subr.mxu0 0.0
    %662 = vmatpush1.msra.mxu0 0.0
    %663 = vmatprep.subr.mxu0 0.0
    %664 = vmatpush1.msra.mxu0 0.0
    %665 = vmatprep.subr.mxu0 0.0
    %666 = vmatpush1.msra.mxu0 0.0
    %667 = vmatprep.subr.mxu0 0.0
    %668 = vmatpush1.msra.mxu0 0.0
    %669 = vmatprep.subr.mxu0 0.0
    %670 = vmatpush1.msra.mxu0 0.0
    %671 = vmatprep.subr.mxu0 0.0
    %672 = vmatpush1.msra.mxu0 0.0
    %673 = vmatprep.subr.mxu0 0.0
    %674 = vmatpush1.msra.mxu0 0.0
    %675 = vmatprep.subr.mxu0 0.0
    %676 = vmatpush1.msra.mxu0 0.0
    %677 = vmatprep.subr.mxu0 0.0
    %678 = vmatpush1.msra.mxu0 0.0
    %679 = vmatprep.subr.mxu0 0.0
    %680 = vmatpush1.msra.mxu0 0.0
    %681 = vmatprep.subr.mxu0 0.0
    %682 = vmatpush1.msra.mxu0 %v203
    %683 = vmatprep.subr.mxu0 0.0
    %684 = vmatpush1.msra.mxu0 %v202
    %685 = vmatprep.subr.mxu0 0.0
    %686 = vmatpush2.msra.mxu0 0.0
    %687 = vmatprep.subr.mxu0 0.0
    %688 = vmatpush2.msra.mxu0 0.0
    %689 = vmatprep.subr.mxu0 0.0
    %690 = vmatpush2.msra.mxu0 0.0
    %691 = vmatprep.subr.mxu0 0.0
    %692 = vmatpush2.msra.mxu0 0.0
    %693 = vmatprep.subr.mxu0 0.0
    %694 = vmatpush2.msra.mxu0 0.0
    %695 = vmatprep.subr.mxu0 0.0
    %696 = vmatpush2.msra.mxu0 0.0
    %697 = vmatprep.subr.mxu0 0.0
    %698 = vmatpush2.msra.mxu0 0.0
    %699 = vmatprep.subr.mxu0 0.0
    %700 = vmatpush2.msra.mxu0 0.0
    %701 = vmatprep.subr.mxu0 0.0
    %702 = vmatpush2.msra.mxu0 0.0
    %703 = vmatprep.subr.mxu0 0.0
    %704 = vmatpush2.msra.mxu0 0.0
    %705 = vmatprep.subr.mxu0 0.0
    %706 = vmatpush2.msra.mxu0 0.0
    %707 = vmatprep.subr.mxu0 0.0
    %708 = vmatpush2.msra.mxu0 0.0
    %709 = vmatprep.subr.mxu0 0.0
    %710 = vmatpush2.msra.mxu0 0.0
    %711 = vmatprep.subr.mxu0 0.0
    %712 = vmatpush2.msra.mxu0 0.0
    %713 = vmatprep.subr.mxu0 0.0
    %714 = vmatpush2.msra.mxu0 0.0
    %715 = vmatprep.subr.mxu0 0.0
    %716 = vmatpush2.msra.mxu0 0.0
    %717 = vmatprep.mubr.f32.mxu0 0.0
    %718 = vmatmul.mubr.f32.gmra.mxu0 %v651
    %v719 = vpop.f32.mrf.mxu0
    %v720 = vadd.f32 0.0, %v719
    %v721 = vpop.f32.mrf.mxu0
    %722 = vdwg.mxu0
    %v724 = vrot.slane %v646, 4
    %725 = vrot.lane.b32.xlu0 %v724, 64
    %v726 = vpop.permute.xlu0 %725
    %v727 = vsel %vm218, %v726, 0
    %729 = vmatprep.subr.mxu0 0.0
    %730 = vmatpush1.msra.mxu0 0.0
    %731 = vmatprep.subr.mxu0 0.0
    %732 = vmatpush1.msra.mxu0 0.0
    %733 = vmatprep.subr.mxu0 0.0
    %734 = vmatpush1.msra.mxu0 0.0
    %735 = vmatprep.subr.mxu0 0.0
    %736 = vmatpush1.msra.mxu0 0.0
    %737 = vmatprep.subr.mxu0 0.0
    %738 = vmatpush1.msra.mxu0 0.0
    %739 = vmatprep.subr.mxu0 0.0
    %740 = vmatpush1.msra.mxu0 0.0
    %741 = vmatprep.subr.mxu0 0.0
    %742 = vmatpush1.msra.mxu0 0.0
    %743 = vmatprep.subr.mxu0 0.0
    %744 = vmatpush1.msra.mxu0 0.0
    %745 = vmatprep.subr.mxu0 0.0
    %746 = vmatpush1.msra.mxu0 0.0
    %747 = vmatprep.subr.mxu0 0.0
    %748 = vmatpush1.msra.mxu0 0.0
    %749 = vmatprep.subr.mxu0 0.0
    %750 = vmatpush1.msra.mxu0 0.0
    %751 = vmatprep.subr.mxu0 0.0
    %752 = vmatpush1.msra.mxu0 0.0
    %753 = vmatprep.subr.mxu0 0.0
    %754 = vmatpush1.msra.mxu0 0.0
    %755 = vmatprep.subr.mxu0 0.0
    %756 = vmatpush1.msra.mxu0 0.0
    %757 = vmatprep.subr.mxu0 0.0
    %758 = vmatpush1.msra.mxu0 %v205
    %759 = vmatprep.subr.mxu0 0.0
    %760 = vmatpush1.msra.mxu0 %v204
    %761 = vmatprep.subr.mxu0 0.0
    %762 = vmatpush2.msra.mxu0 0.0
    %763 = vmatprep.subr.mxu0 0.0
    %764 = vmatpush2.msra.mxu0 0.0
    %765 = vmatprep.subr.mxu0 0.0
    %766 = vmatpush2.msra.mxu0 0.0
    %767 = vmatprep.subr.mxu0 0.0
    %768 = vmatpush2.msra.mxu0 0.0
    %769 = vmatprep.subr.mxu0 0.0
    %770 = vmatpush2.msra.mxu0 0.0
    %771 = vmatprep.subr.mxu0 0.0
    %772 = vmatpush2.msra.mxu0 0.0
    %773 = vmatprep.subr.mxu0 0.0
    %774 = vmatpush2.msra.mxu0 0.0
    %775 = vmatprep.subr.mxu0 0.0
    %776 = vmatpush2.msra.mxu0 0.0
    %777 = vmatprep.subr.mxu0 0.0
    %778 = vmatpush2.msra.mxu0 0.0
    %779 = vmatprep.subr.mxu0 0.0
    %780 = vmatpush2.msra.mxu0 0.0
    %781 = vmatprep.subr.mxu0 0.0
    %782 = vmatpush2.msra.mxu0 0.0
    %783 = vmatprep.subr.mxu0 0.0
    %784 = vmatpush2.msra.mxu0 0.0
    %785 = vmatprep.subr.mxu0 0.0
    %786 = vmatpush2.msra.mxu0 0.0
    %787 = vmatprep.subr.mxu0 0.0
    %788 = vmatpush2.msra.mxu0 0.0
    %789 = vmatprep.subr.mxu0 0.0
    %790 = vmatpush2.msra.mxu0 0.0
    %791 = vmatprep.subr.mxu0 0.0
    %792 = vmatpush2.msra.mxu0 0.0
    %793 = vmatprep.mubr.f32.mxu0 0.0
    %794 = vmatmul.mubr.f32.gmra.mxu0 %v727
    %v795 = vpop.f32.mrf.mxu0
    %v796 = vadd.f32 0.0, %v795
    %v797 = vpop.f32.mrf.mxu0
    %798 = vdwg.mxu0
    %v800 = vrot.slane %v720, 4
    %v802 = vadd.f32 %v194, %v800
    %v803 = vxor.u32 %v802, 2147483648
    %v804 = vmul.f32 %v803, 1.442695
    %v805 = vpow.pop %v804
    %v806 = vadd.f32 %v805, 1.0
    %v807 = vrcp.pop %v806
    %v808 = vmul.f32 1.0, %v807
    %v810 = vrot.slane %v796, 6
    %811 = vrot.lane.b32.xlu0 %v810, 48
    %v812 = vpop.permute.xlu0 %811
    %v814 = vadd.f32 %v199, %v812
    %v815 = vxor.u32 %v814, 2147483648
    %v816 = vmul.f32 %v815, 1.442695
    %v817 = vpow.pop %v816
    %v818 = vadd.f32 %v817, 1.0
    %v819 = vrcp.pop %v818
    %v820 = vmul.f32 1.0, %v819
    %v821 = vadd.f32 %v720, %v382
    %v823 = vrot.slane %v821, 4
    %824 = vrot.lane.b32.xlu0 %v823, 96
    %v825 = vpop.permute.xlu0 %824
    %v827 = vmul.f32 %v808, %v825
    %829 = vrot.lane.b32.xlu0 %v827, 32
    %v830 = vpop.permute.xlu0 %829
    %v832 = vadd.f32 %v194, %v830
    %v833 = vtanh.pop %v832
    %v834 = vadd.f32 %v796, %v397
    %v836 = vrot.slane %v834, 6
    %837 = vrot.lane.b32.xlu0 %v836, 16
    %v838 = vpop.permute.xlu0 %837
    %v840 = vmul.f32 %v820, %v838
    %842 = vrot.lane.b32.xlu0 %v840, 32
    %v843 = vpop.permute.xlu0 %842
    %v845 = vadd.f32 %v199, %v843
    %v846 = vtanh.pop %v845
    %v847 = vsub.f32 1.0, %v808
    %849 = vrot.lane.b32.xlu0 %v833, 112
    %v850 = vpop.permute.xlu0 %849
    %v852 = vmul.f32 %v847, %v850
    %v853 = vrot.slane %v636, 6
    %v855 = vmul.f32 %v808, %v853
    %v856 = vadd.f32 %v852, %v855
    %v857 = vsub.f32 1.0, %v820
    %859 = vrot.lane.b32.xlu0 %v846, 112
    %v860 = vpop.permute.xlu0 %859
    %v862 = vmul.f32 %v857, %v860
    %v863 = vrot.slane %v646, 2
    %v865 = vmul.f32 %v820, %v863
    %v866 = vadd.f32 %v862, %v865
    %v868 = vrot.slane %v856, 4
    %869 = vrot.lane.b32.xlu0 %v868, 112
    %v870 = vpop.permute.xlu0 %869
    %v871 = vsel %vm218, %v870, 0
    %873 = vmatprep.subr.mxu0 0.0
    %874 = vmatpush1.msra.mxu0 0.0
    %875 = vmatprep.subr.mxu0 0.0
    %876 = vmatpush1.msra.mxu0 0.0
    %877 = vmatprep.subr.mxu0 0.0
    %878 = vmatpush1.msra.mxu0 0.0
    %879 = vmatprep.subr.mxu0 0.0
    %880 = vmatpush1.msra.mxu0 0.0
    %881 = vmatprep.subr.mxu0 0.0
    %882 = vmatpush1.msra.mxu0 0.0
    %883 = vmatprep.subr.mxu0 0.0
    %884 = vmatpush1.msra.mxu0 0.0
    %885 = vmatprep.subr.mxu0 0.0
    %886 = vmatpush1.msra.mxu0 0.0
    %887 = vmatprep.subr.mxu0 0.0
    %888 = vmatpush1.msra.mxu0 0.0
    %889 = vmatprep.subr.mxu0 0.0
    %890 = vmatpush1.msra.mxu0 0.0
    %891 = vmatprep.subr.mxu0 0.0
    %892 = vmatpush1.msra.mxu0 0.0
    %893 = vmatprep.subr.mxu0 0.0
    %894 = vmatpush1.msra.mxu0 0.0
    %895 = vmatprep.subr.mxu0 0.0
    %896 = vmatpush1.msra.mxu0 0.0
    %897 = vmatprep.subr.mxu0 0.0
    %898 = vmatpush1.msra.mxu0 0.0
    %899 = vmatprep.subr.mxu0 0.0
    %900 = vmatpush1.msra.mxu0 0.0
    %901 = vmatprep.subr.mxu0 0.0
    %902 = vmatpush1.msra.mxu0 %v203
    %903 = vmatprep.subr.mxu0 0.0
    %904 = vmatpush1.msra.mxu0 %v202
    %905 = vmatprep.subr.mxu0 0.0
    %906 = vmatpush2.msra.mxu0 0.0
    %907 = vmatprep.subr.mxu0 0.0
    %908 = vmatpush2.msra.mxu0 0.0
    %909 = vmatprep.subr.mxu0 0.0
    %910 = vmatpush2.msra.mxu0 0.0
    %911 = vmatprep.subr.mxu0 0.0
    %912 = vmatpush2.msra.mxu0 0.0
    %913 = vmatprep.subr.mxu0 0.0
    %914 = vmatpush2.msra.mxu0 0.0
    %915 = vmatprep.subr.mxu0 0.0
    %916 = vmatpush2.msra.mxu0 0.0
    %917 = vmatprep.subr.mxu0 0.0
    %918 = vmatpush2.msra.mxu0 0.0
    %919 = vmatprep.subr.mxu0 0.0
    %920 = vmatpush2.msra.mxu0 0.0
    %921 = vmatprep.subr.mxu0 0.0
    %922 = vmatpush2.msra.mxu0 0.0
    %923 = vmatprep.subr.mxu0 0.0
    %924 = vmatpush2.msra.mxu0 0.0
    %925 = vmatprep.subr.mxu0 0.0
    %926 = vmatpush2.msra.mxu0 0.0
    %927 = vmatprep.subr.mxu0 0.0
    %928 = vmatpush2.msra.mxu0 0.0
    %929 = vmatprep.subr.mxu0 0.0
    %930 = vmatpush2.msra.mxu0 0.0
    %931 = vmatprep.subr.mxu0 0.0
    %932 = vmatpush2.msra.mxu0 0.0
    %933 = vmatprep.subr.mxu0 0.0
    %934 = vmatpush2.msra.mxu0 0.0
    %935 = vmatprep.subr.mxu0 0.0
    %936 = vmatpush2.msra.mxu0 0.0
    %937 = vmatprep.mubr.f32.mxu0 0.0
    %938 = vmatmul.mubr.f32.gmra.mxu0 %v871
    %v939 = vpop.f32.mrf.mxu0
    %v940 = vadd.f32 0.0, %v939
    %v941 = vpop.f32.mrf.mxu0
    %942 = vdwg.mxu0
    %v944 = vrot.slane %v866, 2
    %945 = vrot.lane.b32.xlu0 %v944, 64
    %v946 = vpop.permute.xlu0 %945
    %v947 = vsel %vm218, %v946, 0
    %949 = vmatprep.subr.mxu0 0.0
    %950 = vmatpush1.msra.mxu0 0.0
    %951 = vmatprep.subr.mxu0 0.0
    %952 = vmatpush1.msra.mxu0 0.0
    %953 = vmatprep.subr.mxu0 0.0
    %954 = vmatpush1.msra.mxu0 0.0
    %955 = vmatprep.subr.mxu0 0.0
    %956 = vmatpush1.msra.mxu0 0.0
    %957 = vmatprep.subr.mxu0 0.0
    %958 = vmatpush1.msra.mxu0 0.0
    %959 = vmatprep.subr.mxu0 0.0
    %960 = vmatpush1.msra.mxu0 0.0
    %961 = vmatprep.subr.mxu0 0.0
    %962 = vmatpush1.msra.mxu0 0.0
    %963 = vmatprep.subr.mxu0 0.0
    %964 = vmatpush1.msra.mxu0 0.0
    %965 = vmatprep.subr.mxu0 0.0
    %966 = vmatpush1.msra.mxu0 0.0
    %967 = vmatprep.subr.mxu0 0.0
    %968 = vmatpush1.msra.mxu0 0.0
    %969 = vmatprep.subr.mxu0 0.0
    %970 = vmatpush1.msra.mxu0 0.0
    %971 = vmatprep.subr.mxu0 0.0
    %972 = vmatpush1.msra.mxu0 0.0
    %973 = vmatprep.subr.mxu0 0.0
    %974 = vmatpush1.msra.mxu0 0.0
    %975 = vmatprep.subr.mxu0 0.0
    %976 = vmatpush1.msra.mxu0 0.0
    %977 = vmatprep.subr.mxu0 0.0
    %978 = vmatpush1.msra.mxu0 %v205
    %979 = vmatprep.subr.mxu0 0.0
    %980 = vmatpush1.msra.mxu0 %v204
    %981 = vmatprep.subr.mxu0 0.0
    %982 = vmatpush2.msra.mxu0 0.0
    %983 = vmatprep.subr.mxu0 0.0
    %984 = vmatpush2.msra.mxu0 0.0
    %985 = vmatprep.subr.mxu0 0.0
    %986 = vmatpush2.msra.mxu0 0.0
    %987 = vmatprep.subr.mxu0 0.0
    %988 = vmatpush2.msra.mxu0 0.0
    %989 = vmatprep.subr.mxu0 0.0
    %990 = vmatpush2.msra.mxu0 0.0
    %991 = vmatprep.subr.mxu0 0.0
    %992 = vmatpush2.msra.mxu0 0.0
    %993 = vmatprep.subr.mxu0 0.0
    %994 = vmatpush2.msra.mxu0 0.0
    %995 = vmatprep.subr.mxu0 0.0
    %996 = vmatpush2.msra.mxu0 0.0
    %997 = vmatprep.subr.mxu0 0.0
    %998 = vmatpush2.msra.mxu0 0.0
    %999 = vmatprep.subr.mxu0 0.0
    %1000 = vmatpush2.msra.mxu0 0.0
    %1001 = vmatprep.subr.mxu0 0.0
    %1002 = vmatpush2.msra.mxu0 0.0
    %1003 = vmatprep.subr.mxu0 0.0
    %1004 = vmatpush2.msra.mxu0 0.0
    %1005 = vmatprep.subr.mxu0 0.0
    %1006 = vmatpush2.msra.mxu0 0.0
    %1007 = vmatprep.subr.mxu0 0.0
    %1008 = vmatpush2.msra.mxu0 0.0
    %1009 = vmatprep.subr.mxu0 0.0
    %1010 = vmatpush2.msra.mxu0 0.0
    %1011 = vmatprep.subr.mxu0 0.0
    %1012 = vmatpush2.msra.mxu0 0.0
    %1013 = vmatprep.mubr.f32.mxu0 0.0
    %1014 = vmatmul.mubr.f32.gmra.mxu0 %v947
    %v1015 = vpop.f32.mrf.mxu0
    %v1016 = vadd.f32 0.0, %v1015
    %v1017 = vpop.f32.mrf.mxu0
    %1018 = vdwg.mxu0
    %v1020 = vrot.slane %v940, 2
    %v1022 = vadd.f32 %v194, %v1020
    %v1023 = vxor.u32 %v1022, 2147483648
    %v1024 = vmul.f32 %v1023, 1.442695
    %v1025 = vpow.pop %v1024
    %v1026 = vadd.f32 %v1025, 1.0
    %v1027 = vrcp.pop %v1026
    %v1028 = vmul.f32 1.0, %v1027
    %1030 = vrot.lane.b32.xlu0 %v1016, 48
    %v1031 = vpop.permute.xlu0 %1030
    %v1033 = vadd.f32 %v199, %v1031
    %v1034 = vxor.u32 %v1033, 2147483648
    %v1035 = vmul.f32 %v1034, 1.442695
    %v1036 = vpow.pop %v1035
    %v1037 = vadd.f32 %v1036, 1.0
    %v1038 = vrcp.pop %v1037
    %v1039 = vmul.f32 1.0, %v1038
    %v1040 = vadd.f32 %v940, %v382
    %v1042 = vrot.slane %v1040, 2
    %1043 = vrot.lane.b32.xlu0 %v1042, 96
    %v1044 = vpop.permute.xlu0 %1043
    %v1046 = vmul.f32 %v1028, %v1044
    %1048 = vrot.lane.b32.xlu0 %v1046, 32
    %v1049 = vpop.permute.xlu0 %1048
    %v1051 = vadd.f32 %v194, %v1049
    %v1052 = vtanh.pop %v1051
    %v1053 = vadd.f32 %v1016, %v397
    %1055 = vrot.lane.b32.xlu0 %v1053, 16
    %v1056 = vpop.permute.xlu0 %1055
    %v1058 = vmul.f32 %v1039, %v1056
    %1060 = vrot.lane.b32.xlu0 %v1058, 32
    %v1061 = vpop.permute.xlu0 %1060
    %v1063 = vadd.f32 %v199, %v1061
    %v1064 = vtanh.pop %v1063
    %v1065 = vsub.f32 1.0, %v1028
    %1067 = vrot.lane.b32.xlu0 %v1052, 112
    %v1068 = vpop.permute.xlu0 %1067
    %v1070 = vmul.f32 %v1065, %v1068
    %v1071 = vrot.slane %v856, 6
    %v1073 = vmul.f32 %v1028, %v1071
    %v1074 = vadd.f32 %v1070, %v1073
    %v1075 = vsub.f32 1.0, %v1039
    %1077 = vrot.lane.b32.xlu0 %v1064, 112
    %v1078 = vpop.permute.xlu0 %1077
    %v1080 = vmul.f32 %v1075, %v1078
    %v1082 = vmul.f32 %v1039, %v944
    %v1083 = vadd.f32 %v1080, %v1082
    %v1085 = vrot.slane %v1074, 6
    %1086 = vrot.lane.b32.xlu0 %v1085, 112
    %v1087 = vpop.permute.xlu0 %1086
    %v1088 = vsel %vm218, %v1087, 0
    %1090 = vmatprep.subr.mxu0 0.0
    %1091 = vmatpush1.msra.mxu0 0.0
    %1092 = vmatprep.subr.mxu0 0.0
    %1093 = vmatpush1.msra.mxu0 0.0
    %1094 = vmatprep.subr.mxu0 0.0
    %1095 = vmatpush1.msra.mxu0 0.0
    %1096 = vmatprep.subr.mxu0 0.0
    %1097 = vmatpush1.msra.mxu0 0.0
    %1098 = vmatprep.subr.mxu0 0.0
    %1099 = vmatpush1.msra.mxu0 0.0
    %1100 = vmatprep.subr.mxu0 0.0
    %1101 = vmatpush1.msra.mxu0 0.0
    %1102 = vmatprep.subr.mxu0 0.0
    %1103 = vmatpush1.msra.mxu0 0.0
    %1104 = vmatprep.subr.mxu0 0.0
    %1105 = vmatpush1.msra.mxu0 0.0
    %1106 = vmatprep.subr.mxu0 0.0
    %1107 = vmatpush1.msra.mxu0 0.0
    %1108 = vmatprep.subr.mxu0 0.0
    %1109 = vmatpush1.msra.mxu0 0.0
    %1110 = vmatprep.subr.mxu0 0.0
    %1111 = vmatpush1.msra.mxu0 0.0
    %1112 = vmatprep.subr.mxu0 0.0
    %1113 = vmatpush1.msra.mxu0 0.0
    %1114 = vmatprep.subr.mxu0 0.0
    %1115 = vmatpush1.msra.mxu0 0.0
    %1116 = vmatprep.subr.mxu0 0.0
    %1117 = vmatpush1.msra.mxu0 0.0
    %1118 = vmatprep.subr.mxu0 0.0
    %1119 = vmatpush1.msra.mxu0 %v203
    %1120 = vmatprep.subr.mxu0 0.0
    %1121 = vmatpush1.msra.mxu0 %v202
    %1122 = vmatprep.subr.mxu0 0.0
    %1123 = vmatpush2.msra.mxu0 0.0
    %1124 = vmatprep.subr.mxu0 0.0
    %1125 = vmatpush2.msra.mxu0 0.0
    %1126 = vmatprep.subr.mxu0 0.0
    %1127 = vmatpush2.msra.mxu0 0.0
    %1128 = vmatprep.subr.mxu0 0.0
    %1129 = vmatpush2.msra.mxu0 0.0
    %1130 = vmatprep.subr.mxu0 0.0
    %1131 = vmatpush2.msra.mxu0 0.0
    %1132 = vmatprep.subr.mxu0 0.0
    %1133 = vmatpush2.msra.mxu0 0.0
    %1134 = vmatprep.subr.mxu0 0.0
    %1135 = vmatpush2.msra.mxu0 0.0
    %1136 = vmatprep.subr.mxu0 0.0
    %1137 = vmatpush2.msra.mxu0 0.0
    %1138 = vmatprep.subr.mxu0 0.0
    %1139 = vmatpush2.msra.mxu0 0.0
    %1140 = vmatprep.subr.mxu0 0.0
    %1141 = vmatpush2.msra.mxu0 0.0
    %1142 = vmatprep.subr.mxu0 0.0
    %1143 = vmatpush2.msra.mxu0 0.0
    %1144 = vmatprep.subr.mxu0 0.0
    %1145 = vmatpush2.msra.mxu0 0.0
    %1146 = vmatprep.subr.mxu0 0.0
    %1147 = vmatpush2.msra.mxu0 0.0
    %1148 = vmatprep.subr.mxu0 0.0
    %1149 = vmatpush2.msra.mxu0 0.0
    %1150 = vmatprep.subr.mxu0 0.0
    %1151 = vmatpush2.msra.mxu0 0.0
    %1152 = vmatprep.subr.mxu0 0.0
    %1153 = vmatpush2.msra.mxu0 0.0
    %1154 = vmatprep.mubr.f32.mxu0 0.0
    %1155 = vmatmul.mubr.f32.gmra.mxu0 %v1088
    %v1156 = vpop.f32.mrf.mxu0
    %v1157 = vadd.f32 0.0, %v1156
    %v1158 = vpop.f32.mrf.mxu0
    %1159 = vdwg.mxu0
    %1161 = vrot.lane.b32.xlu0 %v1083, 64
    %v1162 = vpop.permute.xlu0 %1161
    %v1163 = vsel %vm218, %v1162, 0
    %1165 = vmatprep.subr.mxu0 0.0
    %1166 = vmatpush1.msra.mxu0 0.0
    %1167 = vmatprep.subr.mxu0 0.0
    %1168 = vmatpush1.msra.mxu0 0.0
    %1169 = vmatprep.subr.mxu0 0.0
    %1170 = vmatpush1.msra.mxu0 0.0
    %1171 = vmatprep.subr.mxu0 0.0
    %1172 = vmatpush1.msra.mxu0 0.0
    %1173 = vmatprep.subr.mxu0 0.0
    %1174 = vmatpush1.msra.mxu0 0.0
    %1175 = vmatprep.subr.mxu0 0.0
    %1176 = vmatpush1.msra.mxu0 0.0
    %1177 = vmatprep.subr.mxu0 0.0
    %1178 = vmatpush1.msra.mxu0 0.0
    %1179 = vmatprep.subr.mxu0 0.0
    %1180 = vmatpush1.msra.mxu0 0.0
    %1181 = vmatprep.subr.mxu0 0.0
    %1182 = vmatpush1.msra.mxu0 0.0
    %1183 = vmatprep.subr.mxu0 0.0
    %1184 = vmatpush1.msra.mxu0 0.0
    %1185 = vmatprep.subr.mxu0 0.0
    %1186 = vmatpush1.msra.mxu0 0.0
    %1187 = vmatprep.subr.mxu0 0.0
    %1188 = vmatpush1.msra.mxu0 0.0
    %1189 = vmatprep.subr.mxu0 0.0
    %1190 = vmatpush1.msra.mxu0 0.0
    %1191 = vmatprep.subr.mxu0 0.0
    %1192 = vmatpush1.msra.mxu0 0.0
    %1193 = vmatprep.subr.mxu0 0.0
    %1194 = vmatpush1.msra.mxu0 %v205
    %1195 = vmatprep.subr.mxu0 0.0
    %1196 = vmatpush1.msra.mxu0 %v204
    %1197 = vmatprep.subr.mxu0 0.0
    %1198 = vmatpush2.msra.mxu0 0.0
    %1199 = vmatprep.subr.mxu0 0.0
    %1200 = vmatpush2.msra.mxu0 0.0
    %1201 = vmatprep.subr.mxu0 0.0
    %1202 = vmatpush2.msra.mxu0 0.0
    %1203 = vmatprep.subr.mxu0 0.0
    %1204 = vmatpush2.msra.mxu0 0.0
    %1205 = vmatprep.subr.mxu0 0.0
    %1206 = vmatpush2.msra.mxu0 0.0
    %1207 = vmatprep.subr.mxu0 0.0
    %1208 = vmatpush2.msra.mxu0 0.0
    %1209 = vmatprep.subr.mxu0 0.0
    %1210 = vmatpush2.msra.mxu0 0.0
    %1211 = vmatprep.subr.mxu0 0.0
    %1212 = vmatpush2.msra.mxu0 0.0
    %1213 = vmatprep.subr.mxu0 0.0
    %1214 = vmatpush2.msra.mxu0 0.0
    %1215 = vmatprep.subr.mxu0 0.0
    %1216 = vmatpush2.msra.mxu0 0.0
    %1217 = vmatprep.subr.mxu0 0.0
    %1218 = vmatpush2.msra.mxu0 0.0
    %1219 = vmatprep.subr.mxu0 0.0
    %1220 = vmatpush2.msra.mxu0 0.0
    %1221 = vmatprep.subr.mxu0 0.0
    %1222 = vmatpush2.msra.mxu0 0.0
    %1223 = vmatprep.subr.mxu0 0.0
    %1224 = vmatpush2.msra.mxu0 0.0
    %1225 = vmatprep.subr.mxu0 0.0
    %1226 = vmatpush2.msra.mxu0 0.0
    %1227 = vmatprep.subr.mxu0 0.0
    %1228 = vmatpush2.msra.mxu0 0.0
    %1229 = vmatprep.mubr.f32.mxu0 0.0
    %1230 = vmatmul.mubr.f32.gmra.mxu0 %v1163
    %v1231 = vpop.f32.mrf.mxu0
    %v1232 = vadd.f32 0.0, %v1231
    %v1233 = vpop.f32.mrf.mxu0
    %1234 = vdwg.mxu0
    %v1235 = vadd.f32 %v199, %v1157
    %v1236 = vxor.u32 %v1235, 2147483648
    %v1237 = vmul.f32 %v1236, 1.442695
    %v1238 = vpow.pop %v1237
    %v1239 = vadd.f32 %v1238, 1.0
    %v1240 = vrcp.pop %v1239
    %v1241 = vmul.f32 1.0, %v1240
    %v1243 = vrot.slane %v1232, 2
    %1244 = vrot.lane.b32.xlu0 %v1243, 48
    %v1245 = vpop.permute.xlu0 %1244
    %v1247 = vadd.f32 %v194, %v1245
    %v1248 = vxor.u32 %v1247, 2147483648
    %v1249 = vmul.f32 %v1248, 1.442695
    %v1250 = vpow.pop %v1249
    %v1251 = vadd.f32 %v1250, 1.0
    %v1252 = vrcp.pop %v1251
    %v1253 = vmul.f32 1.0, %v1252
    %v1254 = vadd.f32 %v1157, %v382
    %1256 = vrot.lane.b32.xlu0 %v1254, 96
    %v1257 = vpop.permute.xlu0 %1256
    %v1259 = vmul.f32 %v1241, %v1257
    %1261 = vrot.lane.b32.xlu0 %v1259, 32
    %v1262 = vpop.permute.xlu0 %1261
    %v1264 = vadd.f32 %v199, %v1262
    %v1265 = vtanh.pop %v1264
    %v1266 = vadd.f32 %v1232, %v397
    %v1268 = vrot.slane %v1266, 2
    %1269 = vrot.lane.b32.xlu0 %v1268, 16
    %v1270 = vpop.permute.xlu0 %1269
    %v1272 = vmul.f32 %v1253, %v1270
    %1274 = vrot.lane.b32.xlu0 %v1272, 32
    %v1275 = vpop.permute.xlu0 %1274
    %v1277 = vadd.f32 %v194, %v1275
    %v1278 = vtanh.pop %v1277
    %v1279 = vsub.f32 1.0, %v1241
    %1281 = vrot.lane.b32.xlu0 %v1265, 112
    %v1282 = vpop.permute.xlu0 %1281
    %v1284 = vmul.f32 %v1279, %v1282
    %v1286 = vmul.f32 %v1241, %v1085
    %v1287 = vadd.f32 %v1284, %v1286
    %v1288 = vsub.f32 1.0, %v1253
    %1290 = vrot.lane.b32.xlu0 %v1278, 112
    %v1291 = vpop.permute.xlu0 %1290
    %v1293 = vmul.f32 %v1288, %v1291
    %v1294 = vrot.slane %v1083, 2
    %v1296 = vmul.f32 %v1253, %v1294
    %v1297 = vadd.f32 %v1293, %v1296
    %1299 = vrot.lane.b32.xlu0 %v1287, 112
    %v1300 = vpop.permute.xlu0 %1299
    %v1301 = vsel %vm218, %v1300, 0
    %1303 = vmatprep.subr.mxu0 0.0
    %1304 = vmatpush1.msra.mxu0 0.0
    %1305 = vmatprep.subr.mxu0 0.0
    %1306 = vmatpush1.msra.mxu0 0.0
    %1307 = vmatprep.subr.mxu0 0.0
    %1308 = vmatpush1.msra.mxu0 0.0
    %1309 = vmatprep.subr.mxu0 0.0
    %1310 = vmatpush1.msra.mxu0 0.0
    %1311 = vmatprep.subr.mxu0 0.0
    %1312 = vmatpush1.msra.mxu0 0.0
    %1313 = vmatprep.subr.mxu0 0.0
    %1314 = vmatpush1.msra.mxu0 0.0
    %1315 = vmatprep.subr.mxu0 0.0
    %1316 = vmatpush1.msra.mxu0 0.0
    %1317 = vmatprep.subr.mxu0 0.0
    %1318 = vmatpush1.msra.mxu0 0.0
    %1319 = vmatprep.subr.mxu0 0.0
    %1320 = vmatpush1.msra.mxu0 0.0
    %1321 = vmatprep.subr.mxu0 0.0
    %1322 = vmatpush1.msra.mxu0 0.0
    %1323 = vmatprep.subr.mxu0 0.0
    %1324 = vmatpush1.msra.mxu0 0.0
    %1325 = vmatprep.subr.mxu0 0.0
    %1326 = vmatpush1.msra.mxu0 0.0
    %1327 = vmatprep.subr.mxu0 0.0
    %1328 = vmatpush1.msra.mxu0 0.0
    %1329 = vmatprep.subr.mxu0 0.0
    %1330 = vmatpush1.msra.mxu0 0.0
    %1331 = vmatprep.subr.mxu0 0.0
    %1332 = vmatpush1.msra.mxu0 %v203
    %1333 = vmatprep.subr.mxu0 0.0
    %1334 = vmatpush1.msra.mxu0 %v202
    %1335 = vmatprep.subr.mxu0 0.0
    %1336 = vmatpush2.msra.mxu0 0.0
    %1337 = vmatprep.subr.mxu0 0.0
    %1338 = vmatpush2.msra.mxu0 0.0
    %1339 = vmatprep.subr.mxu0 0.0
    %1340 = vmatpush2.msra.mxu0 0.0
    %1341 = vmatprep.subr.mxu0 0.0
    %1342 = vmatpush2.msra.mxu0 0.0
    %1343 = vmatprep.subr.mxu0 0.0
    %1344 = vmatpush2.msra.mxu0 0.0
    %1345 = vmatprep.subr.mxu0 0.0
    %1346 = vmatpush2.msra.mxu0 0.0
    %1347 = vmatprep.subr.mxu0 0.0
    %1348 = vmatpush2.msra.mxu0 0.0
    %1349 = vmatprep.subr.mxu0 0.0
    %1350 = vmatpush2.msra.mxu0 0.0
    %1351 = vmatprep.subr.mxu0 0.0
    %1352 = vmatpush2.msra.mxu0 0.0
    %1353 = vmatprep.subr.mxu0 0.0
    %1354 = vmatpush2.msra.mxu0 0.0
    %1355 = vmatprep.subr.mxu0 0.0
    %1356 = vmatpush2.msra.mxu0 0.0
    %1357 = vmatprep.subr.mxu0 0.0
    %1358 = vmatpush2.msra.mxu0 0.0
    %1359 = vmatprep.subr.mxu0 0.0
    %1360 = vmatpush2.msra.mxu0 0.0
    %1361 = vmatprep.subr.mxu0 0.0
    %1362 = vmatpush2.msra.mxu0 0.0
    %1363 = vmatprep.subr.mxu0 0.0
    %1364 = vmatpush2.msra.mxu0 0.0
    %1365 = vmatprep.subr.mxu0 0.0
    %1366 = vmatpush2.msra.mxu0 0.0
    %1367 = vmatprep.mubr.f32.mxu0 0.0
    %1368 = vmatmul.mubr.f32.gmra.mxu0 %v1301
    %v1369 = vpop.f32.mrf.mxu0
    %v1370 = vadd.f32 0.0, %v1369
    %v1371 = vpop.f32.mrf.mxu0
    %1372 = vdwg.mxu0
    %v1374 = vrot.slane %v1297, 6
    %1375 = vrot.lane.b32.xlu0 %v1374, 64
    %v1376 = vpop.permute.xlu0 %1375
    %v1377 = vsel %vm218, %v1376, 0
    %1379 = vmatprep.subr.mxu0 0.0
    %1380 = vmatpush1.msra.mxu0 0.0
    %1381 = vmatprep.subr.mxu0 0.0
    %1382 = vmatpush1.msra.mxu0 0.0
    %1383 = vmatprep.subr.mxu0 0.0
    %1384 = vmatpush1.msra.mxu0 0.0
    %1385 = vmatprep.subr.mxu0 0.0
    %1386 = vmatpush1.msra.mxu0 0.0
    %1387 = vmatprep.subr.mxu0 0.0
    %1388 = vmatpush1.msra.mxu0 0.0
    %1389 = vmatprep.subr.mxu0 0.0
    %1390 = vmatpush1.msra.mxu0 0.0
    %1391 = vmatprep.subr.mxu0 0.0
    %1392 = vmatpush1.msra.mxu0 0.0
    %1393 = vmatprep.subr.mxu0 0.0
    %1394 = vmatpush1.msra.mxu0 0.0
    %1395 = vmatprep.subr.mxu0 0.0
    %1396 = vmatpush1.msra.mxu0 0.0
    %1397 = vmatprep.subr.mxu0 0.0
    %1398 = vmatpush1.msra.mxu0 0.0
    %1399 = vmatprep.subr.mxu0 0.0
    %1400 = vmatpush1.msra.mxu0 0.0
    %1401 = vmatprep.subr.mxu0 0.0
    %1402 = vmatpush1.msra.mxu0 0.0
    %1403 = vmatprep.subr.mxu0 0.0
    %1404 = vmatpush1.msra.mxu0 0.0
    %1405 = vmatprep.subr.mxu0 0.0
    %1406 = vmatpush1.msra.mxu0 0.0
    %1407 = vmatprep.subr.mxu0 0.0
    %1408 = vmatpush1.msra.mxu0 %v205
    %1409 = vmatprep.subr.mxu0 0.0
    %1410 = vmatpush1.msra.mxu0 %v204
    %1411 = vmatprep.subr.mxu0 0.0
    %1412 = vmatpush2.msra.mxu0 0.0
    %1413 = vmatprep.subr.mxu0 0.0
    %1414 = vmatpush2.msra.mxu0 0.0
    %1415 = vmatprep.subr.mxu0 0.0
    %1416 = vmatpush2.msra.mxu0 0.0
    %1417 = vmatprep.subr.mxu0 0.0
    %1418 = vmatpush2.msra.mxu0 0.0
    %1419 = vmatprep.subr.mxu0 0.0
    %1420 = vmatpush2.msra.mxu0 0.0
    %1421 = vmatprep.subr.mxu0 0.0
    %1422 = vmatpush2.msra.mxu0 0.0
    %1423 = vmatprep.subr.mxu0 0.0
    %1424 = vmatpush2.msra.mxu0 0.0
    %1425 = vmatprep.subr.mxu0 0.0
    %1426 = vmatpush2.msra.mxu0 0.0
    %1427 = vmatprep.subr.mxu0 0.0
    %1428 = vmatpush2.msra.mxu0 0.0
    %1429 = vmatprep.subr.mxu0 0.0
    %1430 = vmatpush2.msra.mxu0 0.0
    %1431 = vmatprep.subr.mxu0 0.0
    %1432 = vmatpush2.msra.mxu0 0.0
    %1433 = vmatprep.subr.mxu0 0.0
    %1434 = vmatpush2.msra.mxu0 0.0
    %1435 = vmatprep.subr.mxu0 0.0
    %1436 = vmatpush2.msra.mxu0 0.0
    %1437 = vmatprep.subr.mxu0 0.0
    %1438 = vmatpush2.msra.mxu0 0.0
    %1439 = vmatprep.subr.mxu0 0.0
    %1440 = vmatpush2.msra.mxu0 0.0
    %1441 = vmatprep.subr.mxu0 0.0
    %1442 = vmatpush2.msra.mxu0 0.0
    %1443 = vmatprep.mubr.f32.mxu0 0.0
    %1444 = vmatmul.mubr.f32.gmra.mxu0 %v1377
    %v1445 = vpop.f32.mrf.mxu0
    %v1446 = vadd.f32 0.0, %v1445
    %v1447 = vpop.f32.mrf.mxu0
    %1448 = vdwg.mxu0
    %v1450 = vrot.slane %v1370, 6
    %v1452 = vadd.f32 %v199, %v1450
    %v1453 = vxor.u32 %v1452, 2147483648
    %v1454 = vmul.f32 %v1453, 1.442695
    %v1455 = vpow.pop %v1454
    %v1456 = vadd.f32 %v1455, 1.0
    %v1457 = vrcp.pop %v1456
    %v1458 = vmul.f32 1.0, %v1457
    %v1460 = vrot.slane %v1446, 4
    %1461 = vrot.lane.b32.xlu0 %v1460, 48
    %v1462 = vpop.permute.xlu0 %1461
    %v1464 = vadd.f32 %v194, %v1462
    %v1465 = vxor.u32 %v1464, 2147483648
    %v1466 = vmul.f32 %v1465, 1.442695
    %v1467 = vpow.pop %v1466
    %v1468 = vadd.f32 %v1467, 1.0
    %v1469 = vrcp.pop %v1468
    %v1470 = vmul.f32 1.0, %v1469
    %v1471 = vadd.f32 %v1370, %v382
    %v1473 = vrot.slane %v1471, 6
    %1474 = vrot.lane.b32.xlu0 %v1473, 96
    %v1475 = vpop.permute.xlu0 %1474
    %v1477 = vmul.f32 %v1458, %v1475
    %1479 = vrot.lane.b32.xlu0 %v1477, 32
    %v1480 = vpop.permute.xlu0 %1479
    %v1482 = vadd.f32 %v199, %v1480
    %v1483 = vtanh.pop %v1482
    %v1484 = vadd.f32 %v1446, %v397
    %v1486 = vrot.slane %v1484, 4
    %1487 = vrot.lane.b32.xlu0 %v1486, 16
    %v1488 = vpop.permute.xlu0 %1487
    %v1490 = vmul.f32 %v1470, %v1488
    %1492 = vrot.lane.b32.xlu0 %v1490, 32
    %v1493 = vpop.permute.xlu0 %1492
    %v1495 = vadd.f32 %v194, %v1493
    %v1496 = vtanh.pop %v1495
    %v1497 = vsub.f32 1.0, %v1458
    %1499 = vrot.lane.b32.xlu0 %v1483, 112
    %v1500 = vpop.permute.xlu0 %1499
    %v1502 = vmul.f32 %v1497, %v1500
    %v1503 = vrot.slane %v1287, 6
    %v1505 = vmul.f32 %v1458, %v1503
    %v1506 = vadd.f32 %v1502, %v1505
    %v1507 = vsub.f32 1.0, %v1470
    %1509 = vrot.lane.b32.xlu0 %v1496, 112
    %v1510 = vpop.permute.xlu0 %1509
    %v1512 = vmul.f32 %v1507, %v1510
    %v1513 = vrot.slane %v1297, 2
    %v1515 = vmul.f32 %v1470, %v1513
    %v1516 = vadd.f32 %v1512, %v1515
    %v1518 = vrot.slane %v1506, 2
    %1519 = vrot.lane.b32.xlu0 %v1518, 112
    %v1520 = vpop.permute.xlu0 %1519
    %v1521 = vsel %vm218, %v1520, 0
    %1523 = vmatprep.subr.mxu0 0.0
    %1524 = vmatpush1.msra.mxu0 0.0
    %1525 = vmatprep.subr.mxu0 0.0
    %1526 = vmatpush1.msra.mxu0 0.0
    %1527 = vmatprep.subr.mxu0 0.0
    %1528 = vmatpush1.msra.mxu0 0.0
    %1529 = vmatprep.subr.mxu0 0.0
    %1530 = vmatpush1.msra.mxu0 0.0
    %1531 = vmatprep.subr.mxu0 0.0
    %1532 = vmatpush1.msra.mxu0 0.0
    %1533 = vmatprep.subr.mxu0 0.0
    %1534 = vmatpush1.msra.mxu0 0.0
    %1535 = vmatprep.subr.mxu0 0.0
    %1536 = vmatpush1.msra.mxu0 0.0
    %1537 = vmatprep.subr.mxu0 0.0
    %1538 = vmatpush1.msra.mxu0 0.0
    %1539 = vmatprep.subr.mxu0 0.0
    %1540 = vmatpush1.msra.mxu0 0.0
    %1541 = vmatprep.subr.mxu0 0.0
    %1542 = vmatpush1.msra.mxu0 0.0
    %1543 = vmatprep.subr.mxu0 0.0
    %1544 = vmatpush1.msra.mxu0 0.0
    %1545 = vmatprep.subr.mxu0 0.0
    %1546 = vmatpush1.msra.mxu0 0.0
    %1547 = vmatprep.subr.mxu0 0.0
    %1548 = vmatpush1.msra.mxu0 0.0
    %1549 = vmatprep.subr.mxu0 0.0
    %1550 = vmatpush1.msra.mxu0 0.0
    %1551 = vmatprep.subr.mxu0 0.0
    %1552 = vmatpush1.msra.mxu0 %v203
    %1553 = vmatprep.subr.mxu0 0.0
    %1554 = vmatpush1.msra.mxu0 %v202
    %1555 = vmatprep.subr.mxu0 0.0
    %1556 = vmatpush2.msra.mxu0 0.0
    %1557 = vmatprep.subr.mxu0 0.0
    %1558 = vmatpush2.msra.mxu0 0.0
    %1559 = vmatprep.subr.mxu0 0.0
    %1560 = vmatpush2.msra.mxu0 0.0
    %1561 = vmatprep.subr.mxu0 0.0
    %1562 = vmatpush2.msra.mxu0 0.0
    %1563 = vmatprep.subr.mxu0 0.0
    %1564 = vmatpush2.msra.mxu0 0.0
    %1565 = vmatprep.subr.mxu0 0.0
    %1566 = vmatpush2.msra.mxu0 0.0
    %1567 = vmatprep.subr.mxu0 0.0
    %1568 = vmatpush2.msra.mxu0 0.0
    %1569 = vmatprep.subr.mxu0 0.0
    %1570 = vmatpush2.msra.mxu0 0.0
    %1571 = vmatprep.subr.mxu0 0.0
    %1572 = vmatpush2.msra.mxu0 0.0
    %1573 = vmatprep.subr.mxu0 0.0
    %1574 = vmatpush2.msra.mxu0 0.0
    %1575 = vmatprep.subr.mxu0 0.0
    %1576 = vmatpush2.msra.mxu0 0.0
    %1577 = vmatprep.subr.mxu0 0.0
    %1578 = vmatpush2.msra.mxu0 0.0
    %1579 = vmatprep.subr.mxu0 0.0
    %1580 = vmatpush2.msra.mxu0 0.0
    %1581 = vmatprep.subr.mxu0 0.0
    %1582 = vmatpush2.msra.mxu0 0.0
    %1583 = vmatprep.subr.mxu0 0.0
    %1584 = vmatpush2.msra.mxu0 0.0
    %1585 = vmatprep.subr.mxu0 0.0
    %1586 = vmatpush2.msra.mxu0 0.0
    %1587 = vmatprep.mubr.f32.mxu0 0.0
    %1588 = vmatmul.mubr.f32.gmra.mxu0 %v1521
    %v1589 = vpop.f32.mrf.mxu0
    %v1590 = vadd.f32 0.0, %v1589
    %v1591 = vpop.f32.mrf.mxu0
    %1592 = vdwg.mxu0
    %v1594 = vrot.slane %v1516, 4
    %1595 = vrot.lane.b32.xlu0 %v1594, 64
    %v1596 = vpop.permute.xlu0 %1595
    %v1597 = vsel %vm218, %v1596, 0
    %1599 = vmatprep.subr.mxu0 0.0
    %1600 = vmatpush1.msra.mxu0 0.0
    %1601 = vmatprep.subr.mxu0 0.0
    %1602 = vmatpush1.msra.mxu0 0.0
    %1603 = vmatprep.subr.mxu0 0.0
    %1604 = vmatpush1.msra.mxu0 0.0
    %1605 = vmatprep.subr.mxu0 0.0
    %1606 = vmatpush1.msra.mxu0 0.0
    %1607 = vmatprep.subr.mxu0 0.0
    %1608 = vmatpush1.msra.mxu0 0.0
    %1609 = vmatprep.subr.mxu0 0.0
    %1610 = vmatpush1.msra.mxu0 0.0
    %1611 = vmatprep.subr.mxu0 0.0
    %1612 = vmatpush1.msra.mxu0 0.0
    %1613 = vmatprep.subr.mxu0 0.0
    %1614 = vmatpush1.msra.mxu0 0.0
    %1615 = vmatprep.subr.mxu0 0.0
    %1616 = vmatpush1.msra.mxu0 0.0
    %1617 = vmatprep.subr.mxu0 0.0
    %1618 = vmatpush1.msra.mxu0 0.0
    %1619 = vmatprep.subr.mxu0 0.0
    %1620 = vmatpush1.msra.mxu0 0.0
    %1621 = vmatprep.subr.mxu0 0.0
    %1622 = vmatpush1.msra.mxu0 0.0
    %1623 = vmatprep.subr.mxu0 0.0
    %1624 = vmatpush1.msra.mxu0 0.0
    %1625 = vmatprep.subr.mxu0 0.0
    %1626 = vmatpush1.msra.mxu0 0.0
    %1627 = vmatprep.subr.mxu0 0.0
    %1628 = vmatpush1.msra.mxu0 %v205
    %1629 = vmatprep.subr.mxu0 0.0
    %1630 = vmatpush1.msra.mxu0 %v204
    %1631 = vmatprep.subr.mxu0 0.0
    %1632 = vmatpush2.msra.mxu0 0.0
    %1633 = vmatprep.subr.mxu0 0.0
    %1634 = vmatpush2.msra.mxu0 0.0
    %1635 = vmatprep.subr.mxu0 0.0
    %1636 = vmatpush2.msra.mxu0 0.0
    %1637 = vmatprep.subr.mxu0 0.0
    %1638 = vmatpush2.msra.mxu0 0.0
    %1639 = vmatprep.subr.mxu0 0.0
    %1640 = vmatpush2.msra.mxu0 0.0
    %1641 = vmatprep.subr.mxu0 0.0
    %1642 = vmatpush2.msra.mxu0 0.0
    %1643 = vmatprep.subr.mxu0 0.0
    %1644 = vmatpush2.msra.mxu0 0.0
    %1645 = vmatprep.subr.mxu0 0.0
    %1646 = vmatpush2.msra.mxu0 0.0
    %1647 = vmatprep.subr.mxu0 0.0
    %1648 = vmatpush2.msra.mxu0 0.0
    %1649 = vmatprep.subr.mxu0 0.0
    %1650 = vmatpush2.msra.mxu0 0.0
    %1651 = vmatprep.subr.mxu0 0.0
    %1652 = vmatpush2.msra.mxu0 0.0
    %1653 = vmatprep.subr.mxu0 0.0
    %1654 = vmatpush2.msra.mxu0 0.0
    %1655 = vmatprep.subr.mxu0 0.0
    %1656 = vmatpush2.msra.mxu0 0.0
    %1657 = vmatprep.subr.mxu0 0.0
    %1658 = vmatpush2.msra.mxu0 0.0
    %1659 = vmatprep.subr.mxu0 0.0
    %1660 = vmatpush2.msra.mxu0 0.0
    %1661 = vmatprep.subr.mxu0 0.0
    %1662 = vmatpush2.msra.mxu0 0.0
    %1663 = vmatprep.mubr.f32.mxu0 0.0
    %1664 = vmatmul.mubr.f32.gmra.mxu0 %v1597
    %v1665 = vpop.f32.mrf.mxu0
    %v1666 = vadd.f32 0.0, %v1665
    %v1667 = vpop.f32.mrf.mxu0
    %1668 = vdwg.mxu0
    %v1670 = vrot.slane %v1590, 4
    %v1672 = vadd.f32 %v199, %v1670
    %v1673 = vxor.u32 %v1672, 2147483648
    %v1674 = vmul.f32 %v1673, 1.442695
    %v1675 = vpow.pop %v1674
    %v1676 = vadd.f32 %v1675, 1.0
    %v1677 = vrcp.pop %v1676
    %v1678 = vmul.f32 1.0, %v1677
    %v1680 = vrot.slane %v1666, 6
    %1681 = vrot.lane.b32.xlu0 %v1680, 48
    %v1682 = vpop.permute.xlu0 %1681
    %v1684 = vadd.f32 %v194, %v1682
    %v1685 = vxor.u32 %v1684, 2147483648
    %v1686 = vmul.f32 %v1685, 1.442695
    %v1687 = vpow.pop %v1686
    %v1688 = vadd.f32 %v1687, 1.0
    %v1689 = vrcp.pop %v1688
    %v1690 = vmul.f32 1.0, %v1689
    %v1691 = vadd.f32 %v1590, %v382
    %v1693 = vrot.slane %v1691, 4
    %1694 = vrot.lane.b32.xlu0 %v1693, 96
    %v1695 = vpop.permute.xlu0 %1694
    %v1697 = vmul.f32 %v1678, %v1695
    %1699 = vrot.lane.b32.xlu0 %v1697, 32
    %v1700 = vpop.permute.xlu0 %1699
    %v1702 = vadd.f32 %v199, %v1700
    %v1703 = vtanh.pop %v1702
    %v1704 = vadd.f32 %v1666, %v397
    %v1706 = vrot.slane %v1704, 6
    %1707 = vrot.lane.b32.xlu0 %v1706, 16
    %v1708 = vpop.permute.xlu0 %1707
    %v1710 = vmul.f32 %v1690, %v1708
    %1712 = vrot.lane.b32.xlu0 %v1710, 32
    %v1713 = vpop.permute.xlu0 %1712
    %v1715 = vadd.f32 %v194, %v1713
    %v1716 = vtanh.pop %v1715
    %v1717 = vsub.f32 1.0, %v1678
    %1719 = vrot.lane.b32.xlu0 %v1703, 112
    %v1720 = vpop.permute.xlu0 %1719
    %v1722 = vmul.f32 %v1717, %v1720
    %v1723 = vrot.slane %v1506, 6
    %v1725 = vmul.f32 %v1678, %v1723
    %v1726 = vadd.f32 %v1722, %v1725
    %v1727 = vsub.f32 1.0, %v1690
    %1729 = vrot.lane.b32.xlu0 %v1716, 112
    %v1730 = vpop.permute.xlu0 %1729
    %v1732 = vmul.f32 %v1727, %v1730
    %v1733 = vrot.slane %v1516, 2
    %v1735 = vmul.f32 %v1690, %v1733
    %v1736 = vadd.f32 %v1732, %v1735
    %v1738 = vrot.slane %v1726, 4
    %1739 = vrot.lane.b32.xlu0 %v1738, 112
    %v1740 = vpop.permute.xlu0 %1739
    %v1741 = vsel %vm218, %v1740, 0
    %1743 = vmatprep.subr.mxu0 0.0
    %1744 = vmatpush1.msra.mxu0 0.0
    %1745 = vmatprep.subr.mxu0 0.0
    %1746 = vmatpush1.msra.mxu0 0.0
    %1747 = vmatprep.subr.mxu0 0.0
    %1748 = vmatpush1.msra.mxu0 0.0
    %1749 = vmatprep.subr.mxu0 0.0
    %1750 = vmatpush1.msra.mxu0 0.0
    %1751 = vmatprep.subr.mxu0 0.0
    %1752 = vmatpush1.msra.mxu0 0.0
    %1753 = vmatprep.subr.mxu0 0.0
    %1754 = vmatpush1.msra.mxu0 0.0
    %1755 = vmatprep.subr.mxu0 0.0
    %1756 = vmatpush1.msra.mxu0 0.0
    %1757 = vmatprep.subr.mxu0 0.0
    %1758 = vmatpush1.msra.mxu0 0.0
    %1759 = vmatprep.subr.mxu0 0.0
    %1760 = vmatpush1.msra.mxu0 0.0
    %1761 = vmatprep.subr.mxu0 0.0
    %1762 = vmatpush1.msra.mxu0 0.0
    %1763 = vmatprep.subr.mxu0 0.0
    %1764 = vmatpush1.msra.mxu0 0.0
    %1765 = vmatprep.subr.mxu0 0.0
    %1766 = vmatpush1.msra.mxu0 0.0
    %1767 = vmatprep.subr.mxu0 0.0
    %1768 = vmatpush1.msra.mxu0 0.0
    %1769 = vmatprep.subr.mxu0 0.0
    %1770 = vmatpush1.msra.mxu0 0.0
    %1771 = vmatprep.subr.mxu0 0.0
    %1772 = vmatpush1.msra.mxu0 %v203
    %1773 = vmatprep.subr.mxu0 0.0
    %1774 = vmatpush1.msra.mxu0 %v202
    %1775 = vmatprep.subr.mxu0 0.0
    %1776 = vmatpush2.msra.mxu0 0.0
    %1777 = vmatprep.subr.mxu0 0.0
    %1778 = vmatpush2.msra.mxu0 0.0
    %1779 = vmatprep.subr.mxu0 0.0
    %1780 = vmatpush2.msra.mxu0 0.0
    %1781 = vmatprep.subr.mxu0 0.0
    %1782 = vmatpush2.msra.mxu0 0.0
    %1783 = vmatprep.subr.mxu0 0.0
    %1784 = vmatpush2.msra.mxu0 0.0
    %1785 = vmatprep.subr.mxu0 0.0
    %1786 = vmatpush2.msra.mxu0 0.0
    %1787 = vmatprep.subr.mxu0 0.0
    %1788 = vmatpush2.msra.mxu0 0.0
    %1789 = vmatprep.subr.mxu0 0.0
    %1790 = vmatpush2.msra.mxu0 0.0
    %1791 = vmatprep.subr.mxu0 0.0
    %1792 = vmatpush2.msra.mxu0 0.0
    %1793 = vmatprep.subr.mxu0 0.0
    %1794 = vmatpush2.msra.mxu0 0.0
    %1795 = vmatprep.subr.mxu0 0.0
    %1796 = vmatpush2.msra.mxu0 0.0
    %1797 = vmatprep.subr.mxu0 0.0
    %1798 = vmatpush2.msra.mxu0 0.0
    %1799 = vmatprep.subr.mxu0 0.0
    %1800 = vmatpush2.msra.mxu0 0.0
    %1801 = vmatprep.subr.mxu0 0.0
    %1802 = vmatpush2.msra.mxu0 0.0
    %1803 = vmatprep.subr.mxu0 0.0
    %1804 = vmatpush2.msra.mxu0 0.0
    %1805 = vmatprep.subr.mxu0 0.0
    %1806 = vmatpush2.msra.mxu0 0.0
    %1807 = vmatprep.mubr.f32.mxu0 0.0
    %1808 = vmatmul.mubr.f32.gmra.mxu0 %v1741
    %v1809 = vpop.f32.mrf.mxu0
    %v1810 = vadd.f32 0.0, %v1809
    %v1811 = vpop.f32.mrf.mxu0
    %1812 = vdwg.mxu0
    %v1814 = vrot.slane %v1736, 2
    %1815 = vrot.lane.b32.xlu0 %v1814, 64
    %v1816 = vpop.permute.xlu0 %1815
    %v1817 = vsel %vm218, %v1816, 0
    %1819 = vmatprep.subr.mxu0 0.0
    %1820 = vmatpush1.msra.mxu0 0.0
    %1821 = vmatprep.subr.mxu0 0.0
    %1822 = vmatpush1.msra.mxu0 0.0
    %1823 = vmatprep.subr.mxu0 0.0
    %1824 = vmatpush1.msra.mxu0 0.0
    %1825 = vmatprep.subr.mxu0 0.0
    %1826 = vmatpush1.msra.mxu0 0.0
    %1827 = vmatprep.subr.mxu0 0.0
    %1828 = vmatpush1.msra.mxu0 0.0
    %1829 = vmatprep.subr.mxu0 0.0
    %1830 = vmatpush1.msra.mxu0 0.0
    %1831 = vmatprep.subr.mxu0 0.0
    %1832 = vmatpush1.msra.mxu0 0.0
    %1833 = vmatprep.subr.mxu0 0.0
    %1834 = vmatpush1.msra.mxu0 0.0
    %1835 = vmatprep.subr.mxu0 0.0
    %1836 = vmatpush1.msra.mxu0 0.0
    %1837 = vmatprep.subr.mxu0 0.0
    %1838 = vmatpush1.msra.mxu0 0.0
    %1839 = vmatprep.subr.mxu0 0.0
    %1840 = vmatpush1.msra.mxu0 0.0
    %1841 = vmatprep.subr.mxu0 0.0
    %1842 = vmatpush1.msra.mxu0 0.0
    %1843 = vmatprep.subr.mxu0 0.0
    %1844 = vmatpush1.msra.mxu0 0.0
    %1845 = vmatprep.subr.mxu0 0.0
    %1846 = vmatpush1.msra.mxu0 0.0
    %1847 = vmatprep.subr.mxu0 0.0
    %1848 = vmatpush1.msra.mxu0 %v205
    %1849 = vmatprep.subr.mxu0 0.0
    %1850 = vmatpush1.msra.mxu0 %v204
    %1851 = vmatprep.subr.mxu0 0.0
    %1852 = vmatpush2.msra.mxu0 0.0
    %1853 = vmatprep.subr.mxu0 0.0
    %1854 = vmatpush2.msra.mxu0 0.0
    %1855 = vmatprep.subr.mxu0 0.0
    %1856 = vmatpush2.msra.mxu0 0.0
    %1857 = vmatprep.subr.mxu0 0.0
    %1858 = vmatpush2.msra.mxu0 0.0
    %1859 = vmatprep.subr.mxu0 0.0
    %1860 = vmatpush2.msra.mxu0 0.0
    %1861 = vmatprep.subr.mxu0 0.0
    %1862 = vmatpush2.msra.mxu0 0.0
    %1863 = vmatprep.subr.mxu0 0.0
    %1864 = vmatpush2.msra.mxu0 0.0
    %1865 = vmatprep.subr.mxu0 0.0
    %1866 = vmatpush2.msra.mxu0 0.0
    %1867 = vmatprep.subr.mxu0 0.0
    %1868 = vmatpush2.msra.mxu0 0.0
    %1869 = vmatprep.subr.mxu0 0.0
    %1870 = vmatpush2.msra.mxu0 0.0
    %1871 = vmatprep.subr.mxu0 0.0
    %1872 = vmatpush2.msra.mxu0 0.0
    %1873 = vmatprep.subr.mxu0 0.0
    %1874 = vmatpush2.msra.mxu0 0.0
    %1875 = vmatprep.subr.mxu0 0.0
    %1876 = vmatpush2.msra.mxu0 0.0
    %1877 = vmatprep.subr.mxu0 0.0
    %1878 = vmatpush2.msra.mxu0 0.0
    %1879 = vmatprep.subr.mxu0 0.0
    %1880 = vmatpush2.msra.mxu0 0.0
    %1881 = vmatprep.subr.mxu0 0.0
    %1882 = vmatpush2.msra.mxu0 0.0
    %1883 = vmatprep.mubr.f32.mxu0 0.0
    %1884 = vmatmul.mubr.f32.gmra.mxu0 %v1817
    %v1885 = vpop.f32.mrf.mxu0
    %v1886 = vadd.f32 0.0, %v1885
    %v1887 = vpop.f32.mrf.mxu0
    %1888 = vdwg.mxu0
    %v1890 = vrot.slane %v1810, 2
    %v1892 = vadd.f32 %v199, %v1890
    %v1893 = vxor.u32 %v1892, 2147483648
    %v1894 = vmul.f32 %v1893, 1.442695
    %v1895 = vpow.pop %v1894
    %v1896 = vadd.f32 %v1895, 1.0
    %v1897 = vrcp.pop %v1896
    %v1898 = vmul.f32 1.0, %v1897
    %1900 = vrot.lane.b32.xlu0 %v1886, 48
    %v1901 = vpop.permute.xlu0 %1900
    %v1903 = vadd.f32 %v194, %v1901
    %v1904 = vxor.u32 %v1903, 2147483648
    %v1905 = vmul.f32 %v1904, 1.442695
    %v1906 = vpow.pop %v1905
    %v1907 = vadd.f32 %v1906, 1.0
    %v1908 = vrcp.pop %v1907
    %v1909 = vmul.f32 1.0, %v1908
    %v1910 = vadd.f32 %v1810, %v382
    %v1912 = vrot.slane %v1910, 2
    %1913 = vrot.lane.b32.xlu0 %v1912, 96
    %v1914 = vpop.permute.xlu0 %1913
    %v1916 = vmul.f32 %v1898, %v1914
    %1918 = vrot.lane.b32.xlu0 %v1916, 32
    %v1919 = vpop.permute.xlu0 %1918
    %v1921 = vadd.f32 %v199, %v1919
    %v1922 = vtanh.pop %v1921
    %v1923 = vadd.f32 %v1886, %v397
    %1925 = vrot.lane.b32.xlu0 %v1923, 16
    %v1926 = vpop.permute.xlu0 %1925
    %v1928 = vmul.f32 %v1909, %v1926
    %1930 = vrot.lane.b32.xlu0 %v1928, 32
    %v1931 = vpop.permute.xlu0 %1930
    %v1933 = vadd.f32 %v194, %v1931
    %v1934 = vtanh.pop %v1933
    %v1935 = vsub.f32 1.0, %v1898
    %1937 = vrot.lane.b32.xlu0 %v1922, 112
    %v1938 = vpop.permute.xlu0 %1937
    %v1940 = vmul.f32 %v1935, %v1938
    %v1941 = vrot.slane %v1726, 6
    %v1943 = vmul.f32 %v1898, %v1941
    %v1944 = vadd.f32 %v1940, %v1943
    %v1945 = vsub.f32 1.0, %v1909
    %1947 = vrot.lane.b32.xlu0 %v1934, 112
    %v1948 = vpop.permute.xlu0 %1947
    %v1950 = vmul.f32 %v1945, %v1948
    %v1952 = vmul.f32 %v1909, %v1814
    %v1953 = vadd.f32 %v1950, %v1952
    %1955 = vrot.lane.b32.xlu0 %v1944, 112
    %v1956 = vpop.permute.xlu0 %1955
    %v1959 = vrot.slane %v1953, 2
    %1960 = vrot.lane.b32.xlu0 %v1959, 80
    %v1961 = vpop.permute.xlu0 %1960
    %v1963 = vsel %vm218, %v1956, %v1961
    %v1964 = vld [vmem:[#allocation11] sm:$0xff]
    %v1965 = vld [vmem:[#allocation11 + $0x8] sm:$0xff]
    %v1966 = vld [vmem:[#allocation11 + $0x10] sm:$0xff]
    %v1967 = vld [vmem:[#allocation11 + $0x18] sm:$0xff]
    %v1968 = vld [vmem:[%s8] sm:$0x1]
    %v1970 = vlaneseq
    %v1971 = vshrl.u32 %v1970, 7
    %v1972 = vsub.s32 0, %v1971
    %v1973 = vrot.slane %v1968, %v1972
    %v1976 = vrot.slane %v1963, 6
    %v1977 = vsel %vm120, %v1976, 0
    %1979 = vmatprep.subr.mxu0 0.0
    %1980 = vmatpush1.msra.mxu0 0.0
    %1981 = vmatprep.subr.mxu0 0.0
    %1982 = vmatpush1.msra.mxu0 0.0
    %1983 = vmatprep.subr.mxu0 0.0
    %1984 = vmatpush1.msra.mxu0 0.0
    %1985 = vmatprep.subr.mxu0 0.0
    %1986 = vmatpush1.msra.mxu0 0.0
    %1987 = vmatprep.subr.mxu0 0.0
    %1988 = vmatpush1.msra.mxu0 0.0
    %1989 = vmatprep.subr.mxu0 0.0
    %1990 = vmatpush1.msra.mxu0 0.0
    %1991 = vmatprep.subr.mxu0 0.0
    %1992 = vmatpush1.msra.mxu0 0.0
    %1993 = vmatprep.subr.mxu0 0.0
    %1994 = vmatpush1.msra.mxu0 0.0
    %1995 = vmatprep.subr.mxu0 0.0
    %1996 = vmatpush1.msra.mxu0 0.0
    %1997 = vmatprep.subr.mxu0 0.0
    %1998 = vmatpush1.msra.mxu0 0.0
    %1999 = vmatprep.subr.mxu0 0.0
    %2000 = vmatpush1.msra.mxu0 0.0
    %2001 = vmatprep.subr.mxu0 0.0
    %2002 = vmatpush1.msra.mxu0 0.0
    %2003 = vmatprep.subr.mxu0 0.0
    %2004 = vmatpush1.msra.mxu0 %v1967
    %2005 = vmatprep.subr.mxu0 0.0
    %2006 = vmatpush1.msra.mxu0 %v1966
    %2007 = vmatprep.subr.mxu0 0.0
    %2008 = vmatpush1.msra.mxu0 %v1965
    %2009 = vmatprep.subr.mxu0 0.0
    %2010 = vmatpush1.msra.mxu0 %v1964
    %2011 = vmatprep.subr.mxu0 0.0
    %2012 = vmatpush2.msra.mxu0 0.0
    %2013 = vmatprep.subr.mxu0 0.0
    %2014 = vmatpush2.msra.mxu0 0.0
    %2015 = vmatprep.subr.mxu0 0.0
    %2016 = vmatpush2.msra.mxu0 0.0
    %2017 = vmatprep.subr.mxu0 0.0
    %2018 = vmatpush2.msra.mxu0 0.0
    %2019 = vmatprep.subr.mxu0 0.0
    %2020 = vmatpush2.msra.mxu0 0.0
    %2021 = vmatprep.subr.mxu0 0.0
    %2022 = vmatpush2.msra.mxu0 0.0
    %2023 = vmatprep.subr.mxu0 0.0
    %2024 = vmatpush2.msra.mxu0 0.0
    %2025 = vmatprep.subr.mxu0 0.0
    %2026 = vmatpush2.msra.mxu0 0.0
    %2027 = vmatprep.subr.mxu0 0.0
    %2028 = vmatpush2.msra.mxu0 0.0
    %2029 = vmatprep.subr.mxu0 0.0
    %2030 = vmatpush2.msra.mxu0 0.0
    %2031 = vmatprep.subr.mxu0 0.0
    %2032 = vmatpush2.msra.mxu0 0.0
    %2033 = vmatprep.subr.mxu0 0.0
    %2034 = vmatpush2.msra.mxu0 0.0
    %2035 = vmatprep.subr.mxu0 0.0
    %2036 = vmatpush2.msra.mxu0 0.0
    %2037 = vmatprep.subr.mxu0 0.0
    %2038 = vmatpush2.msra.mxu0 0.0
    %2039 = vmatprep.subr.mxu0 0.0
    %2040 = vmatpush2.msra.mxu0 0.0
    %2041 = vmatprep.subr.mxu0 0.0
    %2042 = vmatpush2.msra.mxu0 0.0
    %2043 = vmatprep.mubr.f32.mxu0 0.0
    %2044 = vmatmul.mubr.f32.gmra.mxu0 %v1977
    %v2045 = vpop.f32.mrf.mxu0
    %v2046 = vadd.f32 %v1973, %v2045
    %v2047 = vpop.f32.mrf.mxu0
    %2048 = vdwg.mxu0
    %2049 = vst [vmem:[#allocation12] sm:$0x3] %v2046
    %vm2050 = vcmask 1041408
    %v2051 = vsel %vm2050, %v2046, -inf
    %2052 = vmax.xlane.f32.xlu0 %v2051
    %v2053 = vpop.xlane.xlu0 %2052
    %v2054 = vsub.f32 %v2046, %v2053
    %v2055 = vmul.f32 %v2054, 1.442695
    %v2056 = vpow.pop %v2055
    %v2057 = vsel %vm2050, %v2056, 0.0
    %2058 = vadd.xlane.f32.xlu0 %v2057
    %v2059 = vpop.xlane.xlu0 %2058
    %v2060 = vlog2.pop %v2059
    %v2061 = vmul.f32 %v2060, 0.6931472
    %v2062 = vadd.f32 %v2053, %v2061
    %v2063 = vlaneseq
    %v2064 = vand.u32 %v2063, 127
    %v2065 = vld [vmem:[%s9] sm:$0x3]
    %2066 = vset.pattern.permute.xlu0 0
    %2067 = vperm.xlu0 %2066, %v2065
    %v2068 = vpop.permute.xlu0 %2067
    %vm2069 = vcmp.eq.s32.totalorder %v2064, %v2068
    %v2070 = vsel %vm2069, %v2046, 0.0
    %v2071 = vsel %vm2050, %v2070, 0.0
    %2072 = vadd.xlane.f32.xlu0 %v2071
    %v2073 = vpop.xlane.xlu0 %2072
    %v2074 = vsub.f32 %v2062, %v2073
    %vm2075 = vcmask 1024
    %v2076 = vsel %vm2075, %v2074, 0.0
    %2077 = vadd.xlane.f32.xlu0 %v2076
    %v2078 = vpop.xlane.xlu0 %2077
    %v2079 = vrot.slane %v2078, 4
    %v2080 = vadd.f32 %v2078, %v2079
    %v2081 = vrot.slane %v2080, 2
    %v2082 = vadd.f32 %v2080, %v2081
    %v2083 = vrot.slane %v2082, 1
    %v2084 = vadd.f32 %v2082, %v2083
    %s2085 = vtos %v2084
    %v2086 = vrcp.pop 2.0
    %s2087 = vtos %v2086
    %s2088 = smul.f32 %s2085, %s2087
    %s2089 = scalar_lea.smem [#allocation13], 0
    %2090 = sst [smem:[%s2089]] %s2088
    // Predicated region
    $region62: #{tpu_custom_call.1} parent=1 // pred_check
      _
    $region63: #{tpu_custom_call.1} parent=1 // pred_check_branch
      %2092 = sbr.rel (0) target = $region65
    $region64: #{tpu_custom_call.1} parent=1 // pred_region
      %s2094 = ssub.s32 32, 32
      %2095 = vsyncadd [#allocation4], %s2094
      %s2097 = sshll.u32 [#allocation12], 4
      %s2098 = int_to_ptr.vmem [resolvable:$true] %s2097
      %2100 = dma.vmem_to_hbm [thread:$0]  %s2098, 32, %s10, [#allocation4]
    $region65: #{tpu_custom_call.1} parent=1 // pred_fallthru
      _
    // Predicated region
    $region66: #{tpu_custom_call.1} parent=1 // pred_check
      _
    $region67: #{tpu_custom_call.1} parent=1 // pred_check_branch
      %2102 = sbr.rel (0) target = $region69
    $region68: #{tpu_custom_call.1} parent=1 // pred_region
      %s2104 = ssub.s32 16, 16
      %2105 = vsyncadd [#allocation5], %s2104
      %2108 = dma.smem_to_hbm [#allocation13], 16, %s11, [#allocation5]
    $region69: #{tpu_custom_call.1} parent=1 // pred_fallthru
      _
    // Predicated region
    $region70: #{tpu_custom_call.1} parent=1 // pred_check
      _
    $region71: #{tpu_custom_call.1} parent=1 // pred_check_branch
      %2110 = sbr.rel (0) target = $region73
    $region72: #{tpu_custom_call.1} parent=1 // pred_region
      %2111 = dma.done [#allocation4], 32
    $region73: #{tpu_custom_call.1} parent=1 // pred_fallthru
      _
    // Predicated region
    $region74: #{tpu_custom_call.1} parent=1 // pred_check
      _
    $region75: #{tpu_custom_call.1} parent=1 // pred_check_branch
      %2113 = sbr.rel (0) target = $region77
    $region76: #{tpu_custom_call.1} parent=1 // pred_region
      %2114 = dma.done [#allocation5], 16
    $region77: #{tpu_custom_call.1} parent=1 // pred_fallthru
      _
    %2115 = sfence
    %2116 = vsyncpa [#allocation3], 1
    %2117 = vsyncpa [#allocation7], 1
    %2118 = vsyncpa [#allocation10], 1
    %2119 = vsyncpa [#allocation4], 1
    %2120 = vsyncpa [#allocation5], 1

</llo_original>
